<compile_context>
chip_gen: v7x
topology: tpu7x:2x2x1
jax: 0.10.0
libtpu: 0.0.40
codegen_flags: <defaults>
</compile_context>

<pallas_src>
import jax
import jax.numpy as jnp
from jax.experimental import pallas as pl
from jax.experimental.pallas import tpu as pltpu

H = 40            # input height
C = 32            # conv1 output channels
HP = H // 2       # pooled height (MaxPool2d((2,1), 2))
K3 = 3            # conv taps
HID = 64          # RNN hidden size
HID_PAD = 128     # RNN hidden padded to a full lane group
F1 = 128          # fc1 width
OUT = 2           # fc2 width
OUT_PAD = 128     # fc2 width padded to a full lane group (lane-dense store)
FLAT = HP * C     # 640 flattened pooled features, kernel order (h*C + c)
XPAD = 128        # padded input width (40 samples + conv pad, lane-dense)

MATMUL_DTYPE = jnp.bfloat16   # MXU input dtype (accumulation is f32); bf16 is
                              # native on v5e/v6e/v7x -- keep it everywhere.

BM_CAP = 512                  # max batch-tile rows (multiple of 16)


def cnn_rnn_kernel(x_ref, ae_ref, ao_ref, bc_ref, wih_ref, brnn_ref,
                   wf1_ref, bf1_ref, wf2_ref, bf2_ref, out_ref):
    """One batch tile: conv/relu/pool as two MXU matmuls + 3 more MXU matmuls."""
    x = x_ref[...]                                           # (bm, 128) bf16

    # Conv2d((3,1), pad (1,0)) + bias for the even / odd row of each pool pair:
    #   conv_even[b, h*C+c] = sum_k xp[b, 2h+k]   * w[c, k] + bias[c]
    #   conv_odd [b, h*C+c] = sum_k xp[b, 2h+1+k] * w[c, k] + bias[c]
    # expressed as x @ A_even / x @ A_odd with the tap-selection matrices built
    # in prepare_params.  Result is already the flattened (h, c) feature map.
    conv_e = jnp.dot(x, ae_ref[...],
                     preferred_element_type=jnp.float32) + bc_ref[...]
    conv_o = jnp.dot(x, ao_ref[...],
                     preferred_element_type=jnp.float32) + bc_ref[...]
    # MaxPool2d((2,1),2) over ReLU'd conv == max of the two ReLU'd rows.
    flat = jnp.maximum(jnp.maximum(conv_e, 0.0),
                       jnp.maximum(conv_o, 0.0))             # (bm, 640) f32

    # Single-step RNN with h0 = 0:  h1 = tanh(flat @ W_ih^T + b_ih + b_hh).
    # Hidden dim padded to 128 lanes (padded wih cols / brnn lanes are zero, so
    # padded h lanes are tanh(0) = 0 and the padded wf1 rows are zero).
    acc = jnp.dot(flat.astype(MATMUL_DTYPE), wih_ref[...],
                  preferred_element_type=jnp.float32) + brnn_ref[...]
    h_rnn = jnp.tanh(acc)                                    # (bm, 128)

    f1 = jnp.maximum(
        jnp.dot(h_rnn.astype(MATMUL_DTYPE), wf1_ref[...],
                preferred_element_type=jnp.float32) + bf1_ref[...], 0.0)

    # fc2 padded to 128 output lanes -> lane-dense, unmasked output store.
    out = jnp.dot(f1.astype(MATMUL_DTYPE), wf2_ref[...],
                  preferred_element_type=jnp.float32) + bf2_ref[...]
    out_ref[...] = out                                       # (bm, 128) f32


def prepare_params(pt):
    """PyTorch-layout parameters -> kernel-layout operands.

    Expected PyTorch shapes:
      conv_w (32,1,3,1)  conv_b (32,)
      rnn_w_ih (64,640)  rnn_b_ih (64,)  rnn_b_hh (64,)   [input idx = c*HP + h]
      fc1_w (128,64)     fc1_b (128,)
      fc2_w (2,128)      fc2_b (2,)
    """
    wconv = pt["conv_w"][:, 0, :, 0]                         # (C, 3)  [c, k]

    # Tap-selection matrices: A_even[2h+k, h*C+c] = wconv[c, k],
    #                         A_odd [2h+1+k, h*C+c] = wconv[c, k].
    # Row indices address the conv-padded input xp (xp[0] = left zero pad,
    # xp[1..40] = x, xp[41..127] = 0), so x @ A gives the conv directly.
    h_i = jnp.arange(HP)
    k_i = jnp.arange(K3)
    c_i = jnp.arange(C)
    rows = jnp.broadcast_to(2 * h_i[:, None, None] + k_i[None, :, None],
                            (HP, K3, C)).reshape(-1)
    cols = jnp.broadcast_to(h_i[:, None, None] * C + c_i[None, None, :],
                            (HP, K3, C)).reshape(-1)
    vals = jnp.broadcast_to(wconv.T[None, :, :], (HP, K3, C)).reshape(-1)
    a_even = jnp.zeros((XPAD, FLAT), jnp.float32).at[rows, cols].set(vals)
    a_odd = jnp.zeros((XPAD, FLAT), jnp.float32).at[rows + 1, cols].set(vals)
    bc = jnp.tile(pt["conv_b"], HP)[None, :]                 # (1, 640) [h*C+c]

    # PyTorch flattens pooled (B, C, HP, 1) in (c, h) order; the kernel's flat
    # vector is in (h, c) order -> permute the RNN input-weight rows, then pad
    # the hidden dim 64 -> 128 with zeros.
    wih64 = (pt["rnn_w_ih"].T                                # (640, 64) rows c*HP+h
             .reshape(C, HP, HID).transpose(1, 0, 2)         # -> [h, c, :]
             .reshape(FLAT, HID))                            # rows h*C+c
    wih = jnp.zeros((FLAT, HID_PAD), jnp.float32).at[:, :HID].set(wih64)
    brnn = jnp.zeros((1, HID_PAD), jnp.float32).at[0, :HID].set(
        pt["rnn_b_ih"] + pt["rnn_b_hh"])                     # W_hh @ h0 == 0

    wf1 = jnp.zeros((HID_PAD, F1), jnp.float32).at[:HID, :].set(pt["fc1_w"].T)
    bf1 = pt["fc1_b"][None, :]                               # (1, 128)
    wf2 = jnp.zeros((F1, OUT_PAD), jnp.float32).at[:, :OUT].set(pt["fc2_w"].T)
    bf2 = jnp.zeros((1, OUT_PAD), jnp.float32).at[0, :OUT].set(pt["fc2_b"])

    return {
        "a_even": a_even.astype(MATMUL_DTYPE),
        "a_odd": a_odd.astype(MATMUL_DTYPE),
        "bc": bc.astype(jnp.float32),
        "wih": wih.astype(MATMUL_DTYPE),
        "brnn": brnn.astype(jnp.float32),
        "wf1": wf1.astype(MATMUL_DTYPE),
        "bf1": bf1.astype(jnp.float32),
        "wf2": wf2.astype(MATMUL_DTYPE),
        "bf2": bf2.astype(jnp.float32),
    }


def _round_up(n, m):
    return ((n + m - 1) // m) * m


def _pick_bm(batch):
    """Batch-tile rows: multiple of 16 (bf16 sublanes), cap at BM_CAP, and
    >= 2 grid blocks for mid-size batches so both v7x TensorCores get work."""
    b16 = _round_up(batch, 16)
    if batch < 128:
        return b16                        # single small block
    if b16 <= 2 * BM_CAP:
        return _round_up((batch + 1) // 2, 16)   # exactly ~2 blocks
    return BM_CAP


def _full_spec(a):
    nd = a.ndim
    return pl.BlockSpec(a.shape, lambda i, _nd=nd: (0,) * _nd)


@jax.jit
def cnn_rnn_forward(x_nchw, kp):
    """x_nchw: (B, 1, 40, 1).  Returns (B, 2) float32."""
    B = x_nchw.shape[0]
    x2d = x_nchw[:, 0, :, 0]                                 # (B, 40)

    bm = _pick_bm(B)
    b_pad = _round_up(B, bm)

    # Layout plumbing only: pad batch rows, add the conv's left zero pad (one
    # column) and zero-fill out to 128 lanes (conv right pad + MXU K padding --
    # the matching A_even/A_odd rows are zero anyway).  bf16 halves input DMA.
    xp = jnp.pad(x2d, ((0, b_pad - B), (1, XPAD - H - 1))).astype(MATMUL_DTYPE)

    args = (xp, kp["a_even"], kp["a_odd"], kp["bc"], kp["wih"], kp["brnn"],
            kp["wf1"], kp["bf1"], kp["wf2"], kp["bf2"])
    in_specs = [pl.BlockSpec((bm, XPAD), lambda i: (i, 0))]
    in_specs += [_full_spec(a) for a in args[1:]]

    out = pl.pallas_call(
        cnn_rnn_kernel,
        grid=(b_pad // bm,),
        in_specs=in_specs,
        out_specs=pl.BlockSpec((bm, OUT_PAD), lambda i: (i, 0)),
        out_shape=jax.ShapeDtypeStruct((b_pad, OUT_PAD), jnp.float32),
        compiler_params=pltpu.CompilerParams(
            dimension_semantics=("parallel",)),
    )(*args)
    return out[:B, :OUT]


def reference(x_nchw, pt):
    """Pure-JAX f32 transcription of the PyTorch forward (PyTorch layouts)."""
    x = x_nchw[:, 0, :, 0].astype(jnp.float32)               # (B, 40)
    B = x.shape[0]
    xp = jnp.pad(x, ((0, 0), (1, 1)))
    taps = jnp.stack([xp[:, k:k + H] for k in range(K3)], axis=-1)  # (B, H, 3)
    conv = jnp.einsum("bhk,ck->bch", taps, pt["conv_w"][:, 0, :, 0])
    conv = jax.nn.relu(conv + pt["conv_b"][None, :, None])   # (B, C, H)
    pooled = jnp.max(conv.reshape(B, C, HP, 2), axis=-1)     # (B, C, HP)
    flat = pooled.reshape(B, C * HP)                         # PyTorch (c, h) order
    h1 = jnp.tanh(flat @ pt["rnn_w_ih"].T + pt["rnn_b_ih"] + pt["rnn_b_hh"])
    f1 = jax.nn.relu(h1 @ pt["fc1_w"].T + pt["fc1_b"])
    return f1 @ pt["fc2_w"].T + pt["fc2_b"]


if __name__ == "__main__":
    key = jax.random.PRNGKey(0)
    ks = jax.random.split(key, 10)
    B = 32                                  # matches the module's example input
    x = jax.random.normal(ks[0], (B, 1, H, 1), jnp.float32)

    # Synthetic parameters in PyTorch layout (rnn weight_hh omitted: single
    # time step with h0 = 0, so W_hh @ h0 contributes exactly zero).
    pt_params = {
        "conv_w": 0.3 * jax.random.normal(ks[1], (C, 1, K3, 1), jnp.float32),
        "conv_b": 0.1 * jax.random.normal(ks[2], (C,), jnp.float32),
        "rnn_w_ih": 0.05 * jax.random.normal(ks[3], (HID, FLAT), jnp.float32),
        "rnn_b_ih": 0.05 * jax.random.normal(ks[4], (HID,), jnp.float32),
        "rnn_b_hh": 0.05 * jax.random.normal(ks[5], (HID,), jnp.float32),
        "fc1_w": 0.1 * jax.random.normal(ks[6], (F1, HID), jnp.float32),
        "fc1_b": 0.1 * jax.random.normal(ks[7], (F1,), jnp.float32),
        "fc2_w": 0.1 * jax.random.normal(ks[8], (OUT, F1), jnp.float32),
        "fc2_b": 0.1 * jax.random.normal(ks[9], (OUT,), jnp.float32),
    }

    kparams = prepare_params(pt_params)
    out = jax.block_until_ready(cnn_rnn_forward(x, kparams))
    ref = reference(x, pt_params)

    assert out.shape == (B, OUT), out.shape
    # bf16 MXU operands (f32 accumulation) across conv/RNN/fc -> bf16 tolerance.
    tol = 3e-2 if MATMUL_DTYPE == jnp.bfloat16 else 1e-4
    if not bool(jnp.allclose(out, ref, atol=tol, rtol=tol)):
        err = float(jnp.max(jnp.abs(out - ref)))
        raise AssertionError(f"Pallas kernel mismatch vs reference (max|err|={err})")
    print("KERNEL_OK")
</pallas_src>

<mosaic_0001>
module attributes {stable_mosaic.version = 11 : i64} {
  func.func @cnn_rnn_kernel(%arg0: i32, %arg1: memref<32x128xbf16, #tpu.memory_space<vmem>>, %arg2: memref<128x640xbf16, #tpu.memory_space<vmem>>, %arg3: memref<128x640xbf16, #tpu.memory_space<vmem>>, %arg4: memref<1x640xf32, #tpu.memory_space<vmem>>, %arg5: memref<640x128xbf16, #tpu.memory_space<vmem>>, %arg6: memref<1x128xf32, #tpu.memory_space<vmem>>, %arg7: memref<128x128xbf16, #tpu.memory_space<vmem>>, %arg8: memref<1x128xf32, #tpu.memory_space<vmem>>, %arg9: memref<128x128xbf16, #tpu.memory_space<vmem>>, %arg10: memref<1x128xf32, #tpu.memory_space<vmem>>, %arg11: memref<32x128xf32, #tpu.memory_space<vmem>>) attributes {dimension_semantics = [#tpu.dimension_semantics<parallel>], iteration_bounds = array<i64: 1>, scalar_prefetch = 0 : i64, scratch_operands = 0 : i64, tpu.core_type = #tpu.core_type<tc>, window_params = [{transform_indices = @transform_0, window_bounds = array<i64: 32, 128>}, {pipeline_mode = #tpu.pipeline_mode<synchronous>, transform_indices = @transform_1, window_bounds = array<i64: 128, 640>}, {pipeline_mode = #tpu.pipeline_mode<synchronous>, transform_indices = @transform_2, window_bounds = array<i64: 128, 640>}, {pipeline_mode = #tpu.pipeline_mode<synchronous>, transform_indices = @transform_3, window_bounds = array<i64: 1, 640>}, {pipeline_mode = #tpu.pipeline_mode<synchronous>, transform_indices = @transform_4, window_bounds = array<i64: 640, 128>}, {pipeline_mode = #tpu.pipeline_mode<synchronous>, transform_indices = @transform_5, window_bounds = array<i64: 1, 128>}, {pipeline_mode = #tpu.pipeline_mode<synchronous>, transform_indices = @transform_6, window_bounds = array<i64: 128, 128>}, {pipeline_mode = #tpu.pipeline_mode<synchronous>, transform_indices = @transform_7, window_bounds = array<i64: 1, 128>}, {pipeline_mode = #tpu.pipeline_mode<synchronous>, transform_indices = @transform_8, window_bounds = array<i64: 128, 128>}, {pipeline_mode = #tpu.pipeline_mode<synchronous>, transform_indices = @transform_9, window_bounds = array<i64: 1, 128>}, {transform_indices = @transform_10, window_bounds = array<i64: 32, 128>}]} {
    %c0 = arith.constant 0 : index
    %c0_0 = arith.constant 0 : index
    %0 = vector.load %arg1[%c0, %c0_0] : memref<32x128xbf16, #tpu.memory_space<vmem>>, vector<32x128xbf16>
    %c0_1 = arith.constant 0 : index
    %c0_2 = arith.constant 0 : index
    %1 = vector.load %arg2[%c0_1, %c0_2] : memref<128x640xbf16, #tpu.memory_space<vmem>>, vector<128x640xbf16>
    %cst = arith.constant dense<0.000000e+00> : vector<32x640xf32>
    %2 = tpu.matmul %0, %1, %cst {dimension_numbers = #tpu.dot_dimension_numbers<[1], [0], [0], [1], [0, 0, 1, 1], [], []>} : vector<32x128xbf16>, vector<128x640xbf16>, vector<32x640xf32> -> vector<32x640xf32>
    %c0_3 = arith.constant 0 : index
    %c0_4 = arith.constant 0 : index
    %3 = vector.load %arg4[%c0_3, %c0_4] : memref<1x640xf32, #tpu.memory_space<vmem>>, vector<1x640xf32>
    %4 = vector.broadcast %3 : vector<1x640xf32> to vector<32x640xf32>
    %5 = arith.addf %2, %4 : vector<32x640xf32>
    %c0_5 = arith.constant 0 : index
    %c0_6 = arith.constant 0 : index
    %6 = vector.load %arg3[%c0_5, %c0_6] : memref<128x640xbf16, #tpu.memory_space<vmem>>, vector<128x640xbf16>
    %cst_7 = arith.constant dense<0.000000e+00> : vector<32x640xf32>
    %7 = tpu.matmul %0, %6, %cst_7 {dimension_numbers = #tpu.dot_dimension_numbers<[1], [0], [0], [1], [0, 0, 1, 1], [], []>} : vector<32x128xbf16>, vector<128x640xbf16>, vector<32x640xf32> -> vector<32x640xf32>
    %c0_8 = arith.constant 0 : index
    %c0_9 = arith.constant 0 : index
    %8 = vector.load %arg4[%c0_8, %c0_9] : memref<1x640xf32, #tpu.memory_space<vmem>>, vector<1x640xf32>
    %9 = vector.broadcast %8 : vector<1x640xf32> to vector<32x640xf32>
    %10 = arith.addf %7, %9 : vector<32x640xf32>
    %cst_10 = arith.constant 0.000000e+00 : f32
    %11 = vector.broadcast %cst_10 : f32 to vector<32x640xf32>
    %12 = arith.maximumf %5, %11 : vector<32x640xf32>
    %cst_11 = arith.constant 0.000000e+00 : f32
    %13 = vector.broadcast %cst_11 : f32 to vector<32x640xf32>
    %14 = arith.maximumf %10, %13 : vector<32x640xf32>
    %15 = arith.maximumf %12, %14 : vector<32x640xf32>
    %16 = arith.truncf %15 : vector<32x640xf32> to vector<32x640xbf16>
    %c0_12 = arith.constant 0 : index
    %c0_13 = arith.constant 0 : index
    %17 = vector.load %arg5[%c0_12, %c0_13] : memref<640x128xbf16, #tpu.memory_space<vmem>>, vector<640x128xbf16>
    %cst_14 = arith.constant dense<0.000000e+00> : vector<32x128xf32>
    %18 = tpu.matmul %16, %17, %cst_14 {dimension_numbers = #tpu.dot_dimension_numbers<[1], [0], [0], [1], [0, 0, 1, 1], [], []>} : vector<32x640xbf16>, vector<640x128xbf16>, vector<32x128xf32> -> vector<32x128xf32>
    %c0_15 = arith.constant 0 : index
    %c0_16 = arith.constant 0 : index
    %19 = vector.load %arg6[%c0_15, %c0_16] : memref<1x128xf32, #tpu.memory_space<vmem>>, vector<1x128xf32>
    %20 = vector.broadcast %19 : vector<1x128xf32> to vector<32x128xf32>
    %21 = arith.addf %18, %20 : vector<32x128xf32>
    %22 = math.tanh %21 : vector<32x128xf32>
    %23 = arith.truncf %22 : vector<32x128xf32> to vector<32x128xbf16>
    %c0_17 = arith.constant 0 : index
    %c0_18 = arith.constant 0 : index
    %24 = vector.load %arg7[%c0_17, %c0_18] : memref<128x128xbf16, #tpu.memory_space<vmem>>, vector<128x128xbf16>
    %cst_19 = arith.constant dense<0.000000e+00> : vector<32x128xf32>
    %25 = tpu.matmul %23, %24, %cst_19 {dimension_numbers = #tpu.dot_dimension_numbers<[1], [0], [0], [1], [0, 0, 1, 1], [], []>} : vector<32x128xbf16>, vector<128x128xbf16>, vector<32x128xf32> -> vector<32x128xf32>
    %c0_20 = arith.constant 0 : index
    %c0_21 = arith.constant 0 : index
    %26 = vector.load %arg8[%c0_20, %c0_21] : memref<1x128xf32, #tpu.memory_space<vmem>>, vector<1x128xf32>
    %27 = vector.broadcast %26 : vector<1x128xf32> to vector<32x128xf32>
    %28 = arith.addf %25, %27 : vector<32x128xf32>
    %cst_22 = arith.constant 0.000000e+00 : f32
    %29 = vector.broadcast %cst_22 : f32 to vector<32x128xf32>
    %30 = arith.maximumf %28, %29 : vector<32x128xf32>
    %31 = arith.truncf %30 : vector<32x128xf32> to vector<32x128xbf16>
    %c0_23 = arith.constant 0 : index
    %c0_24 = arith.constant 0 : index
    %32 = vector.load %arg9[%c0_23, %c0_24] : memref<128x128xbf16, #tpu.memory_space<vmem>>, vector<128x128xbf16>
    %cst_25 = arith.constant dense<0.000000e+00> : vector<32x128xf32>
    %33 = tpu.matmul %31, %32, %cst_25 {dimension_numbers = #tpu.dot_dimension_numbers<[1], [0], [0], [1], [0, 0, 1, 1], [], []>} : vector<32x128xbf16>, vector<128x128xbf16>, vector<32x128xf32> -> vector<32x128xf32>
    %c0_26 = arith.constant 0 : index
    %c0_27 = arith.constant 0 : index
    %34 = vector.load %arg10[%c0_26, %c0_27] : memref<1x128xf32, #tpu.memory_space<vmem>>, vector<1x128xf32>
    %35 = vector.broadcast %34 : vector<1x128xf32> to vector<32x128xf32>
    %36 = arith.addf %33, %35 : vector<32x128xf32>
    %c0_28 = arith.constant 0 : index
    %c0_29 = arith.constant 0 : index
    %37 = vector.load %arg11[%c0_28, %c0_29] : memref<32x128xf32, #tpu.memory_space<vmem>>, vector<32x128xf32>
    tpu.vector_store %arg11[%c0_28, %c0_29], %36 {strides = array<i32>} : memref<32x128xf32, #tpu.memory_space<vmem>>, vector<32x128xf32>,
    return
  }
  func.func @transform_0(%arg0: i32) -> (i32, i32) {
    %c0_i32 = arith.constant 0 : i32
    %c0_i32_0 = arith.constant 0 : i32
    return %arg0, %c0_i32 : i32, i32
  }
  func.func @transform_1(%arg0: i32) -> (i32, i32) {
    %c0_i32 = arith.constant 0 : i32
    %c0_i32_0 = arith.constant 0 : i32
    %c0_i32_1 = arith.constant 0 : i32
    return %c0_i32, %c0_i32_0 : i32, i32
  }
  func.func @transform_2(%arg0: i32) -> (i32, i32) {
    %c0_i32 = arith.constant 0 : i32
    %c0_i32_0 = arith.constant 0 : i32
    %c0_i32_1 = arith.constant 0 : i32
    return %c0_i32, %c0_i32_0 : i32, i32
  }
  func.func @transform_3(%arg0: i32) -> (i32, i32) {
    %c0_i32 = arith.constant 0 : i32
    %c0_i32_0 = arith.constant 0 : i32
    %c0_i32_1 = arith.constant 0 : i32
    return %c0_i32, %c0_i32_0 : i32, i32
  }
  func.func @transform_4(%arg0: i32) -> (i32, i32) {
    %c0_i32 = arith.constant 0 : i32
    %c0_i32_0 = arith.constant 0 : i32
    %c0_i32_1 = arith.constant 0 : i32
    return %c0_i32, %c0_i32_0 : i32, i32
  }
  func.func @transform_5(%arg0: i32) -> (i32, i32) {
    %c0_i32 = arith.constant 0 : i32
    %c0_i32_0 = arith.constant 0 : i32
    %c0_i32_1 = arith.constant 0 : i32
    return %c0_i32, %c0_i32_0 : i32, i32
  }
  func.func @transform_6(%arg0: i32) -> (i32, i32) {
    %c0_i32 = arith.constant 0 : i32
    %c0_i32_0 = arith.constant 0 : i32
    %c0_i32_1 = arith.constant 0 : i32
    return %c0_i32, %c0_i32_0 : i32, i32
  }
  func.func @transform_7(%arg0: i32) -> (i32, i32) {
    %c0_i32 = arith.constant 0 : i32
    %c0_i32_0 = arith.constant 0 : i32
    %c0_i32_1 = arith.constant 0 : i32
    return %c0_i32, %c0_i32_0 : i32, i32
  }
  func.func @transform_8(%arg0: i32) -> (i32, i32) {
    %c0_i32 = arith.constant 0 : i32
    %c0_i32_0 = arith.constant 0 : i32
    %c0_i32_1 = arith.constant 0 : i32
    return %c0_i32, %c0_i32_0 : i32, i32
  }
  func.func @transform_9(%arg0: i32) -> (i32, i32) {
    %c0_i32 = arith.constant 0 : i32
    %c0_i32_0 = arith.constant 0 : i32
    %c0_i32_1 = arith.constant 0 : i32
    return %c0_i32, %c0_i32_0 : i32, i32
  }
  func.func @transform_10(%arg0: i32) -> (i32, i32) {
    %c0_i32 = arith.constant 0 : i32
    %c0_i32_0 = arith.constant 0 : i32
    return %arg0, %c0_i32 : i32, i32
  }
}

</mosaic_0001>

<llo_original>
// kernel: cnn_rnn_forward.1
$region0: #{cnn_rnn_forward.1}
  #allocation0 [shape = 'u32[]', space=smem, size = 0x4, offset = 0x4, fixed_abs, tag = 'smem constant byte address 0x4 - core index']
  #allocation1 [shape = 'u32[144,128]{1,0:T(1,128)}', space=vmem, size = 0x12000, scoped, tag = 'internal scratch']
  %s0 = inlined_call_operand.vmem [shape: bf16[32,128], index: 0, kind: input, shape index: {}]
  %s1 = inlined_call_operand.hbm [shape: bf16[128,640], index: 1, kind: input, shape index: {}]
  %s2 = inlined_call_operand.hbm [shape: bf16[128,640], index: 2, kind: input, shape index: {}]
  %s3 = inlined_call_operand.vmem [shape: f32[1,640], index: 3, kind: input, shape index: {}]
  %s4 = inlined_call_operand.hbm [shape: bf16[640,128], index: 4, kind: input, shape index: {}]
  %s5 = inlined_call_operand.vmem [shape: f32[1,128], index: 5, kind: input, shape index: {}]
  %s6 = inlined_call_operand.vmem [shape: bf16[128,128], index: 6, kind: input, shape index: {}]
  %s7 = inlined_call_operand.vmem [shape: f32[1,128], index: 7, kind: input, shape index: {}]
  %s8 = inlined_call_operand.hbm [shape: bf16[128,128], index: 8, kind: input, shape index: {}]
  %s9 = inlined_call_operand.vmem [shape: f32[1,128], index: 9, kind: input, shape index: {}]
  %s10 = inlined_call_operand.vmem [shape: f32[32,128], index: 10, kind: output, shape index: {}]
  %s11 = sld [smem:[#allocation0]]
  $region66: #{cnn_rnn_forward.1} parent=0
    _
  %s13 = ssub.s32 1, %s11
  %s14 = scalar_select 0, %s13, %s11
  $region1: #{cnn_rnn_forward.1} parent=0
    #allocation2 [shape = 'u8[163840]{0}', space=vmem, size = 0x28000, scoped, tag = 'input window, operand 1, single buffered']
    #allocation3 [shape = 's32[1]{0}', space=sflag, size = 0x4, scoped, tag = 'scoped memory for cnn_rnn_forward.1']
    #allocation4 [shape = 'u8[163840]{0}', space=vmem, size = 0x28000, scoped, tag = 'input window, operand 2, single buffered']
    #allocation5 [shape = 's32[1]{0}', space=sflag, size = 0x4, scoped, tag = 'scoped memory for cnn_rnn_forward.1']
    #allocation6 [shape = 'u8[163840]{0}', space=vmem, size = 0x28000, scoped, tag = 'input window, operand 4, single buffered']
    #allocation7 [shape = 'u8[32768]{0}', space=vmem, size = 0x8000, scoped, tag = 'input window, operand 8, single buffered']
    #allocation8 [shape = 's32[1]{0}', space=sflag, size = 0x4, scoped, tag = 'scoped memory for cnn_rnn_forward.1']
    %15 = vsyncpa [#allocation3], 0
    %16 = vsyncpa [#allocation5], 0
    %17 = vsyncpa [#allocation8], 0
    // Predicated region
    $region2: #{cnn_rnn_forward.1} parent=1 // pred_check
      _
    $region3: #{cnn_rnn_forward.1} parent=1 // pred_check_branch
      %19 = sbr.rel (0) target = $region5
    $region4: #{cnn_rnn_forward.1} parent=1 // pred_region
      _
    $region5: #{cnn_rnn_forward.1} parent=1 // pred_fallthru
      _
    // Predicated region
    $region6: #{cnn_rnn_forward.1} parent=1 // pred_check
      _
    $region7: #{cnn_rnn_forward.1} parent=1 // pred_check_branch
      %21 = sbr.rel (0) target = $region9
    $region8: #{cnn_rnn_forward.1} parent=1 // pred_region
      %s23 = ssub.s32 5120, 5120
      %24 = vsyncadd [#allocation3], %s23
      %s25 = sshll.u32 [#allocation2], 4
      %s26 = int_to_ptr.vmem [resolvable:$true] %s25
      %31 = dma.hbm_to_vmem [thread:$0]  %s1, 5120, %s26, [#allocation3], 320, 320, 20
    $region9: #{cnn_rnn_forward.1} parent=1 // pred_fallthru
      _
    // Predicated region
    $region10: #{cnn_rnn_forward.1} parent=1 // pred_check
      _
    $region11: #{cnn_rnn_forward.1} parent=1 // pred_check_branch
      %33 = sbr.rel (0) target = $region13
    $region12: #{cnn_rnn_forward.1} parent=1 // pred_region
      %s35 = ssub.s32 5120, 5120
      %36 = vsyncadd [#allocation5], %s35
      %s37 = sshll.u32 [#allocation4], 4
      %s38 = int_to_ptr.vmem [resolvable:$true] %s37
      %43 = dma.hbm_to_vmem [thread:$0]  %s2, 5120, %s38, [#allocation5], 320, 320, 20
    $region13: #{cnn_rnn_forward.1} parent=1 // pred_fallthru
      _
    // Predicated region
    $region14: #{cnn_rnn_forward.1} parent=1 // pred_check
      _
    $region15: #{cnn_rnn_forward.1} parent=1 // pred_check_branch
      %45 = sbr.rel (0) target = $region17
    $region16: #{cnn_rnn_forward.1} parent=1 // pred_region
      _
    $region17: #{cnn_rnn_forward.1} parent=1 // pred_fallthru
      _
    // Predicated region
    $region18: #{cnn_rnn_forward.1} parent=1 // pred_check
      _
    $region19: #{cnn_rnn_forward.1} parent=1 // pred_check_branch
      %47 = sbr.rel (0) target = $region21
    $region20: #{cnn_rnn_forward.1} parent=1 // pred_region
      %s49 = ssub.s32 5120, 5120
      %50 = vsyncadd [#allocation5], %s49
      %s51 = sshll.u32 [#allocation6], 4
      %s52 = int_to_ptr.vmem [resolvable:$true] %s51
      %57 = dma.hbm_to_vmem [thread:$0]  %s4, 5120, %s52, [#allocation5], 64, 64, 4
    $region21: #{cnn_rnn_forward.1} parent=1 // pred_fallthru
      _
    // Predicated region
    $region22: #{cnn_rnn_forward.1} parent=1 // pred_check
      _
    $region23: #{cnn_rnn_forward.1} parent=1 // pred_check_branch
      %59 = sbr.rel (0) target = $region25
    $region24: #{cnn_rnn_forward.1} parent=1 // pred_region
      _
    $region25: #{cnn_rnn_forward.1} parent=1 // pred_fallthru
      _
    // Predicated region
    $region26: #{cnn_rnn_forward.1} parent=1 // pred_check
      _
    $region27: #{cnn_rnn_forward.1} parent=1 // pred_check_branch
      %61 = sbr.rel (0) target = $region29
    $region28: #{cnn_rnn_forward.1} parent=1 // pred_region
      _
    $region29: #{cnn_rnn_forward.1} parent=1 // pred_fallthru
      _
    // Predicated region
    $region30: #{cnn_rnn_forward.1} parent=1 // pred_check
      _
    $region31: #{cnn_rnn_forward.1} parent=1 // pred_check_branch
      %63 = sbr.rel (0) target = $region33
    $region32: #{cnn_rnn_forward.1} parent=1 // pred_region
      _
    $region33: #{cnn_rnn_forward.1} parent=1 // pred_fallthru
      _
    // Predicated region
    $region34: #{cnn_rnn_forward.1} parent=1 // pred_check
      _
    $region35: #{cnn_rnn_forward.1} parent=1 // pred_check_branch
      %65 = sbr.rel (0) target = $region37
    $region36: #{cnn_rnn_forward.1} parent=1 // pred_region
      %s67 = ssub.s32 1024, 1024
      %68 = vsyncadd [#allocation8], %s67
      %s69 = sshll.u32 [#allocation7], 4
      %s70 = int_to_ptr.vmem [resolvable:$true] %s69
      %75 = dma.hbm_to_vmem [thread:$0]  %s8, 1024, %s70, [#allocation8], 64, 64, 4
    $region37: #{cnn_rnn_forward.1} parent=1 // pred_fallthru
      _
    // Predicated region
    $region38: #{cnn_rnn_forward.1} parent=1 // pred_check
      _
    $region39: #{cnn_rnn_forward.1} parent=1 // pred_check_branch
      %77 = sbr.rel (0) target = $region41
    $region40: #{cnn_rnn_forward.1} parent=1 // pred_region
      _
    $region41: #{cnn_rnn_forward.1} parent=1 // pred_fallthru
      _
    // Predicated region
    $region42: #{cnn_rnn_forward.1} parent=1 // pred_check
      _
    $region43: #{cnn_rnn_forward.1} parent=1 // pred_check_branch
      %79 = sbr.rel (0) target = $region45
    $region44: #{cnn_rnn_forward.1} parent=1 // pred_region
      %80 = dma.done [#allocation3], 5120
    $region45: #{cnn_rnn_forward.1} parent=1 // pred_fallthru
      _
    // Predicated region
    $region46: #{cnn_rnn_forward.1} parent=1 // pred_check
      _
    $region47: #{cnn_rnn_forward.1} parent=1 // pred_check_branch
      %82 = sbr.rel (0) target = $region49
    $region48: #{cnn_rnn_forward.1} parent=1 // pred_region
      %83 = dma.done [#allocation5], 5120
    $region49: #{cnn_rnn_forward.1} parent=1 // pred_fallthru
      _
    // Predicated region
    $region50: #{cnn_rnn_forward.1} parent=1 // pred_check
      _
    $region51: #{cnn_rnn_forward.1} parent=1 // pred_check_branch
      %85 = sbr.rel (0) target = $region53
    $region52: #{cnn_rnn_forward.1} parent=1 // pred_region
      %86 = dma.done [#allocation5], 5120
    $region53: #{cnn_rnn_forward.1} parent=1 // pred_fallthru
      _
    // Predicated region
    $region54: #{cnn_rnn_forward.1} parent=1 // pred_check
      _
    $region55: #{cnn_rnn_forward.1} parent=1 // pred_check_branch
      %88 = sbr.rel (0) target = $region57
    $region56: #{cnn_rnn_forward.1} parent=1 // pred_region
      %89 = dma.done [#allocation8], 1024
    $region57: #{cnn_rnn_forward.1} parent=1 // pred_fallthru
      _
    %v91 = vld [vmem:[%s0] sm:$0xf]
    %v92 = vld [vmem:[%s0 + $0x4] sm:$0xf]
    %v93 = vld [vmem:[%s0 + $0x8] sm:$0xf]
    %v94 = vld [vmem:[%s0 + $0xc] sm:$0xf]
    %v95 = vld [vmem:[#allocation2] sm:$0xff]
    %v96 = vld [vmem:[#allocation2 + $0x8] sm:$0xff]
    %v97 = vld [vmem:[#allocation2 + $0x10] sm:$0xf]
    %v98 = vld [vmem:[#allocation2 + $0x14] sm:$0xff]
    %v99 = vld [vmem:[#allocation2 + $0x1c] sm:$0xff]
    %v100 = vld [vmem:[#allocation2 + $0x24] sm:$0xf]
    %v101 = vld [vmem:[#allocation2 + $0x28] sm:$0xff]
    %v102 = vld [vmem:[#allocation2 + $0x30] sm:$0xff]
    %v103 = vld [vmem:[#allocation2 + $0x38] sm:$0xf]
    %v104 = vld [vmem:[#allocation2 + $0x3c] sm:$0xff]
    %v105 = vld [vmem:[#allocation2 + $0x44] sm:$0xff]
    %v106 = vld [vmem:[#allocation2 + $0x4c] sm:$0xf]
    %v107 = vld [vmem:[#allocation2 + $0x50] sm:$0xff]
    %v108 = vld [vmem:[#allocation2 + $0x58] sm:$0xff]
    %v109 = vld [vmem:[#allocation2 + $0x60] sm:$0xf]
    %v110 = vld [vmem:[#allocation2 + $0x64] sm:$0xff]
    %v111 = vld [vmem:[#allocation2 + $0x6c] sm:$0xff]
    %v112 = vld [vmem:[#allocation2 + $0x74] sm:$0xf]
    %v113 = vld [vmem:[#allocation2 + $0x78] sm:$0xff]
    %v114 = vld [vmem:[#allocation2 + $0x80] sm:$0xff]
    %v115 = vld [vmem:[#allocation2 + $0x88] sm:$0xf]
    %v116 = vld [vmem:[#allocation2 + $0x8c] sm:$0xff]
    %v117 = vld [vmem:[#allocation2 + $0x94] sm:$0xff]
    %v118 = vld [vmem:[#allocation2 + $0x9c] sm:$0xf]
    %v119 = vld [vmem:[#allocation2 + $0xa0] sm:$0xff]
    %v120 = vld [vmem:[#allocation2 + $0xa8] sm:$0xff]
    %v121 = vld [vmem:[#allocation2 + $0xb0] sm:$0xf]
    %v122 = vld [vmem:[#allocation2 + $0xb4] sm:$0xff]
    %v123 = vld [vmem:[#allocation2 + $0xbc] sm:$0xff]
    %v124 = vld [vmem:[#allocation2 + $0xc4] sm:$0xf]
    %v125 = vld [vmem:[#allocation2 + $0xc8] sm:$0xff]
    %v126 = vld [vmem:[#allocation2 + $0xd0] sm:$0xff]
    %v127 = vld [vmem:[#allocation2 + $0xd8] sm:$0xf]
    %v128 = vld [vmem:[#allocation2 + $0xdc] sm:$0xff]
    %v129 = vld [vmem:[#allocation2 + $0xe4] sm:$0xff]
    %v130 = vld [vmem:[#allocation2 + $0xec] sm:$0xf]
    %v131 = vld [vmem:[#allocation2 + $0xf0] sm:$0xff]
    %v132 = vld [vmem:[#allocation2 + $0xf8] sm:$0xff]
    %v133 = vld [vmem:[#allocation2 + $0x100] sm:$0xf]
    %v134 = vld [vmem:[#allocation2 + $0x104] sm:$0xff]
    %v135 = vld [vmem:[#allocation2 + $0x10c] sm:$0xff]
    %v136 = vld [vmem:[#allocation2 + $0x114] sm:$0xf]
    %v137 = vld [vmem:[#allocation2 + $0x118] sm:$0xff]
    %v138 = vld [vmem:[#allocation2 + $0x120] sm:$0xff]
    %v139 = vld [vmem:[#allocation2 + $0x128] sm:$0xf]
    %v140 = vld [vmem:[#allocation2 + $0x12c] sm:$0xff]
    %v141 = vld [vmem:[#allocation2 + $0x134] sm:$0xff]
    %v142 = vld [vmem:[#allocation2 + $0x13c] sm:$0xf]
    %v143 = vld [vmem:[%s3] sm:$0x1f]
    %v145 = vlaneseq
    %v146 = vshrl.u32 %v145, 7
    %v147 = vsub.s32 0, %v146
    %v148 = vrot.slane %v143, %v147
    %v149 = vlaneseq
    %v150 = vshrl.u32 %v149, 7
    %v151 = vsub.s32 1, %v150
    %v152 = vrot.slane %v143, %v151
    %v153 = vlaneseq
    %v154 = vshrl.u32 %v153, 7
    %v155 = vsub.s32 2, %v154
    %v156 = vrot.slane %v143, %v155
    %v157 = vlaneseq
    %v158 = vshrl.u32 %v157, 7
    %v159 = vsub.s32 3, %v158
    %v160 = vrot.slane %v143, %v159
    %v161 = vlaneseq
    %v162 = vshrl.u32 %v161, 7
    %v163 = vsub.s32 4, %v162
    %v164 = vrot.slane %v143, %v163
    %v174 = vunpack.c.l.b16 %v91
    %v175 = vunpack.c.l.b16 %v92
    %v176 = vunpack.c.l.b16 %v93
    %v177 = vunpack.c.l.b16 %v94
    %v178 = vpack.c.b16 %v175, %v174
    %v179 = vpack.c.b16 %v177, %v176
    %v230 = vunpack.c.l.b16 %v95
    %v231 = vunpack.c.h.b16 %v95
    %v232 = vunpack.c.l.b16 %v96
    %v233 = vunpack.c.h.b16 %v96
    %v234 = vunpack.c.l.b16 %v97
    %v235 = vunpack.c.l.b16 %v98
    %v236 = vunpack.c.h.b16 %v98
    %v237 = vunpack.c.l.b16 %v99
    %v238 = vunpack.c.h.b16 %v99
    %v239 = vunpack.c.l.b16 %v100
    %v240 = vunpack.c.l.b16 %v101
    %v241 = vunpack.c.h.b16 %v101
    %v242 = vunpack.c.l.b16 %v102
    %v243 = vunpack.c.h.b16 %v102
    %v244 = vunpack.c.l.b16 %v103
    %v245 = vunpack.c.l.b16 %v104
    %v246 = vunpack.c.h.b16 %v104
    %v247 = vunpack.c.l.b16 %v105
    %v248 = vunpack.c.h.b16 %v105
    %v249 = vunpack.c.l.b16 %v106
    %v250 = vunpack.c.l.b16 %v107
    %v251 = vunpack.c.h.b16 %v107
    %v252 = vunpack.c.l.b16 %v108
    %v253 = vunpack.c.h.b16 %v108
    %v254 = vunpack.c.l.b16 %v109
    %v255 = vunpack.c.l.b16 %v110
    %v256 = vunpack.c.h.b16 %v110
    %v257 = vunpack.c.l.b16 %v111
    %v258 = vunpack.c.h.b16 %v111
    %v259 = vunpack.c.l.b16 %v112
    %v260 = vunpack.c.l.b16 %v113
    %v261 = vunpack.c.h.b16 %v113
    %v262 = vunpack.c.l.b16 %v114
    %v263 = vunpack.c.h.b16 %v114
    %v264 = vunpack.c.l.b16 %v115
    %v265 = vunpack.c.l.b16 %v116
    %v266 = vunpack.c.h.b16 %v116
    %v267 = vunpack.c.l.b16 %v117
    %v268 = vunpack.c.h.b16 %v117
    %v269 = vunpack.c.l.b16 %v118
    %v270 = vunpack.c.l.b16 %v119
    %v271 = vunpack.c.h.b16 %v119
    %v272 = vunpack.c.l.b16 %v120
    %v273 = vunpack.c.h.b16 %v120
    %v274 = vunpack.c.l.b16 %v121
    %v275 = vunpack.c.l.b16 %v122
    %v276 = vunpack.c.h.b16 %v122
    %v277 = vunpack.c.l.b16 %v123
    %v278 = vunpack.c.h.b16 %v123
    %v279 = vunpack.c.l.b16 %v124
    %v280 = vunpack.c.l.b16 %v125
    %v281 = vunpack.c.h.b16 %v125
    %v282 = vunpack.c.l.b16 %v126
    %v283 = vunpack.c.h.b16 %v126
    %v284 = vunpack.c.l.b16 %v127
    %v285 = vunpack.c.l.b16 %v128
    %v286 = vunpack.c.h.b16 %v128
    %v287 = vunpack.c.l.b16 %v129
    %v288 = vunpack.c.h.b16 %v129
    %v289 = vunpack.c.l.b16 %v130
    %v290 = vunpack.c.l.b16 %v131
    %v291 = vunpack.c.h.b16 %v131
    %v292 = vunpack.c.l.b16 %v132
    %v293 = vunpack.c.h.b16 %v132
    %v294 = vunpack.c.l.b16 %v133
    %v295 = vunpack.c.l.b16 %v134
    %v296 = vunpack.c.h.b16 %v134
    %v297 = vunpack.c.l.b16 %v135
    %v298 = vunpack.c.h.b16 %v135
    %v299 = vunpack.c.l.b16 %v136
    %v300 = vunpack.c.l.b16 %v137
    %v301 = vunpack.c.h.b16 %v137
    %v302 = vunpack.c.l.b16 %v138
    %v303 = vunpack.c.h.b16 %v138
    %v304 = vunpack.c.l.b16 %v139
    %v305 = vunpack.c.l.b16 %v140
    %v306 = vunpack.c.h.b16 %v140
    %v307 = vunpack.c.l.b16 %v141
    %v308 = vunpack.c.h.b16 %v141
    %v309 = vunpack.c.l.b16 %v142
    %v310 = vpack.c.b16 %v235, %v230
    %v311 = vpack.c.b16 %v236, %v231
    %v312 = vpack.c.b16 %v237, %v232
    %v313 = vpack.c.b16 %v238, %v233
    %v314 = vpack.c.b16 %v239, %v234
    %v315 = vpack.c.b16 %v245, %v240
    %v316 = vpack.c.b16 %v246, %v241
    %v317 = vpack.c.b16 %v247, %v242
    %v318 = vpack.c.b16 %v248, %v243
    %v319 = vpack.c.b16 %v249, %v244
    %v320 = vpack.c.b16 %v255, %v250
    %v321 = vpack.c.b16 %v256, %v251
    %v322 = vpack.c.b16 %v257, %v252
    %v323 = vpack.c.b16 %v258, %v253
    %v324 = vpack.c.b16 %v259, %v254
    %v325 = vpack.c.b16 %v265, %v260
    %v326 = vpack.c.b16 %v266, %v261
    %v327 = vpack.c.b16 %v267, %v262
    %v328 = vpack.c.b16 %v268, %v263
    %v329 = vpack.c.b16 %v269, %v264
    %v330 = vpack.c.b16 %v275, %v270
    %v331 = vpack.c.b16 %v276, %v271
    %v332 = vpack.c.b16 %v277, %v272
    %v333 = vpack.c.b16 %v278, %v273
    %v334 = vpack.c.b16 %v279, %v274
    %v335 = vpack.c.b16 %v285, %v280
    %v336 = vpack.c.b16 %v286, %v281
    %v337 = vpack.c.b16 %v287, %v282
    %v338 = vpack.c.b16 %v288, %v283
    %v339 = vpack.c.b16 %v289, %v284
    %v340 = vpack.c.b16 %v295, %v290
    %v341 = vpack.c.b16 %v296, %v291
    %v342 = vpack.c.b16 %v297, %v292
    %v343 = vpack.c.b16 %v298, %v293
    %v344 = vpack.c.b16 %v299, %v294
    %v345 = vpack.c.b16 %v305, %v300
    %v346 = vpack.c.b16 %v306, %v301
    %v347 = vpack.c.b16 %v307, %v302
    %v348 = vpack.c.b16 %v308, %v303
    %v349 = vpack.c.b16 %v309, %v304
    %390 = vmatprep.subr.bf16.mxu0 %v311
    %391 = vmatpush1.bf16.msra.mxu0 %v310
    %392 = vmatprep.subr.bf16.mxu0 %v316
    %393 = vmatpush1.bf16.msra.mxu0 %v315
    %394 = vmatprep.subr.bf16.mxu0 %v321
    %395 = vmatpush1.bf16.msra.mxu0 %v320
    %396 = vmatprep.subr.bf16.mxu0 %v326
    %397 = vmatpush1.bf16.msra.mxu0 %v325
    %398 = vmatprep.subr.bf16.mxu0 %v331
    %399 = vmatpush1.bf16.msra.mxu0 %v330
    %400 = vmatprep.subr.bf16.mxu0 %v336
    %401 = vmatpush1.bf16.msra.mxu0 %v335
    %402 = vmatprep.subr.bf16.mxu0 %v341
    %403 = vmatpush1.bf16.msra.mxu0 %v340
    %404 = vmatprep.subr.bf16.mxu0 %v346
    %405 = vmatpush1.bf16.msra.mxu0 %v345
    %406 = vmatprep.subr.bf16.mxu0 0
    %407 = vmatpush1.bf16.msra.mxu0 0
    %408 = vmatprep.subr.bf16.mxu0 0
    %409 = vmatpush1.bf16.msra.mxu0 0
    %410 = vmatprep.subr.bf16.mxu0 0
    %411 = vmatpush1.bf16.msra.mxu0 0
    %412 = vmatprep.subr.bf16.mxu0 0
    %413 = vmatpush1.bf16.msra.mxu0 0
    %414 = vmatprep.subr.bf16.mxu0 0
    %415 = vmatpush1.bf16.msra.mxu0 0
    %416 = vmatprep.subr.bf16.mxu0 0
    %417 = vmatpush1.bf16.msra.mxu0 0
    %418 = vmatprep.subr.bf16.mxu0 0
    %419 = vmatpush1.bf16.msra.mxu0 0
    %420 = vmatprep.subr.bf16.mxu0 0
    %421 = vmatpush1.bf16.msra.mxu0 0
    %422 = vmatprep.mubr.bf16.mxu0 0
    %423 = vmatmul.mubr.bf16.gmra.mrb[0].mxu0 %v178
    %v424 = vpop.f32.mrb[0].mxu0
    %v425 = vadd.f32 %v148, %v424
    %v426 = vpop.f32.mrb[0].mxu0
    %v427 = vadd.f32 %v152, %v426
    %v428 = vpop.f32.mrb[0].mxu0
    %v429 = vadd.f32 %v148, %v428
    %v430 = vpop.f32.mrb[0].mxu0
    %v431 = vadd.f32 %v152, %v430
    %432 = vmatprep.mubr.bf16.mxu0 0
    %433 = vmatmul.mubr.bf16.gmra.mrb[0].mxu0 %v179
    %v434 = vpop.f32.mrb[0].mxu0
    %v435 = vadd.f32 %v148, %v434
    %v436 = vpop.f32.mrb[0].mxu0
    %v437 = vadd.f32 %v152, %v436
    %v438 = vpop.f32.mrb[0].mxu0
    %v439 = vadd.f32 %v148, %v438
    %v440 = vpop.f32.mrb[0].mxu0
    %v441 = vadd.f32 %v152, %v440
    %442 = vdwg.mxu0
    %443 = vmatprep.subr.bf16.mxu0 %v313
    %444 = vmatpush1.bf16.msra.mxu0 %v312
    %445 = vmatprep.subr.bf16.mxu0 %v318
    %446 = vmatpush1.bf16.msra.mxu0 %v317
    %447 = vmatprep.subr.bf16.mxu0 %v323
    %448 = vmatpush1.bf16.msra.mxu0 %v322
    %449 = vmatprep.subr.bf16.mxu0 %v328
    %450 = vmatpush1.bf16.msra.mxu0 %v327
    %451 = vmatprep.subr.bf16.mxu0 %v333
    %452 = vmatpush1.bf16.msra.mxu0 %v332
    %453 = vmatprep.subr.bf16.mxu0 %v338
    %454 = vmatpush1.bf16.msra.mxu0 %v337
    %455 = vmatprep.subr.bf16.mxu0 %v343
    %456 = vmatpush1.bf16.msra.mxu0 %v342
    %457 = vmatprep.subr.bf16.mxu0 %v348
    %458 = vmatpush1.bf16.msra.mxu0 %v347
    %459 = vmatprep.subr.bf16.mxu0 0
    %460 = vmatpush1.bf16.msra.mxu0 0
    %461 = vmatprep.subr.bf16.mxu0 0
    %462 = vmatpush1.bf16.msra.mxu0 0
    %463 = vmatprep.subr.bf16.mxu0 0
    %464 = vmatpush1.bf16.msra.mxu0 0
    %465 = vmatprep.subr.bf16.mxu0 0
    %466 = vmatpush1.bf16.msra.mxu0 0
    %467 = vmatprep.subr.bf16.mxu0 0
    %468 = vmatpush1.bf16.msra.mxu0 0
    %469 = vmatprep.subr.bf16.mxu0 0
    %470 = vmatpush1.bf16.msra.mxu0 0
    %471 = vmatprep.subr.bf16.mxu0 0
    %472 = vmatpush1.bf16.msra.mxu0 0
    %473 = vmatprep.subr.bf16.mxu0 0
    %474 = vmatpush1.bf16.msra.mxu0 0
    %475 = vmatprep.mubr.bf16.mxu0 0
    %476 = vmatmul.mubr.bf16.gmra.mrb[0].mxu0 %v178
    %v477 = vpop.f32.mrb[0].mxu0
    %v478 = vadd.f32 %v156, %v477
    %v479 = vpop.f32.mrb[0].mxu0
    %v480 = vadd.f32 %v160, %v479
    %v481 = vpop.f32.mrb[0].mxu0
    %v482 = vadd.f32 %v156, %v481
    %v483 = vpop.f32.mrb[0].mxu0
    %v484 = vadd.f32 %v160, %v483
    %485 = vmatprep.mubr.bf16.mxu0 0
    %486 = vmatmul.mubr.bf16.gmra.mrb[0].mxu0 %v179
    %v487 = vpop.f32.mrb[0].mxu0
    %v488 = vadd.f32 %v156, %v487
    %v489 = vpop.f32.mrb[0].mxu0
    %v490 = vadd.f32 %v160, %v489
    %v491 = vpop.f32.mrb[0].mxu0
    %v492 = vadd.f32 %v156, %v491
    %v493 = vpop.f32.mrb[0].mxu0
    %v494 = vadd.f32 %v160, %v493
    %495 = vdwg.mxu0
    %496 = vmatprep.subr.bf16.mxu0 0
    %497 = vmatpush1.bf16.msra.mxu0 %v314
    %498 = vmatprep.subr.bf16.mxu0 0
    %499 = vmatpush1.bf16.msra.mxu0 %v319
    %500 = vmatprep.subr.bf16.mxu0 0
    %501 = vmatpush1.bf16.msra.mxu0 %v324
    %502 = vmatprep.subr.bf16.mxu0 0
    %503 = vmatpush1.bf16.msra.mxu0 %v329
    %504 = vmatprep.subr.bf16.mxu0 0
    %505 = vmatpush1.bf16.msra.mxu0 %v334
    %506 = vmatprep.subr.bf16.mxu0 0
    %507 = vmatpush1.bf16.msra.mxu0 %v339
    %508 = vmatprep.subr.bf16.mxu0 0
    %509 = vmatpush1.bf16.msra.mxu0 %v344
    %510 = vmatprep.subr.bf16.mxu0 0
    %511 = vmatpush1.bf16.msra.mxu0 %v349
    %512 = vmatprep.subr.bf16.mxu0 0
    %513 = vmatpush1.bf16.msra.mxu0 0
    %514 = vmatprep.subr.bf16.mxu0 0
    %515 = vmatpush1.bf16.msra.mxu0 0
    %516 = vmatprep.subr.bf16.mxu0 0
    %517 = vmatpush1.bf16.msra.mxu0 0
    %518 = vmatprep.subr.bf16.mxu0 0
    %519 = vmatpush1.bf16.msra.mxu0 0
    %520 = vmatprep.subr.bf16.mxu0 0
    %521 = vmatpush1.bf16.msra.mxu0 0
    %522 = vmatprep.subr.bf16.mxu0 0
    %523 = vmatpush1.bf16.msra.mxu0 0
    %524 = vmatprep.subr.bf16.mxu0 0
    %525 = vmatpush1.bf16.msra.mxu0 0
    %526 = vmatprep.subr.bf16.mxu0 0
    %527 = vmatpush1.bf16.msra.mxu0 0
    %528 = vmatprep.mubr.bf16.mxu0 0
    %529 = vmatmul.mubr.bf16.gmra.mrb[0].mxu0 %v178
    %v530 = vpop.f32.mrb[0].mxu0
    %v531 = vadd.f32 %v164, %v530
    %v532 = vpop.f32.mrb[0].mxu0
    %v533 = vpop.f32.mrb[0].mxu0
    %v534 = vadd.f32 %v164, %v533
    %v535 = vpop.f32.mrb[0].mxu0
    %536 = vmatprep.mubr.bf16.mxu0 0
    %537 = vmatmul.mubr.bf16.gmra.mrb[0].mxu0 %v179
    %v538 = vpop.f32.mrb[0].mxu0
    %v539 = vadd.f32 %v164, %v538
    %v540 = vpop.f32.mrb[0].mxu0
    %v541 = vpop.f32.mrb[0].mxu0
    %v542 = vadd.f32 %v164, %v541
    %v543 = vpop.f32.mrb[0].mxu0
    %544 = vdwg.mxu0
    %v545 = vld [vmem:[#allocation4] sm:$0xff]
    %v546 = vld [vmem:[#allocation4 + $0x8] sm:$0xff]
    %v547 = vld [vmem:[#allocation4 + $0x10] sm:$0xf]
    %v548 = vld [vmem:[#allocation4 + $0x14] sm:$0xff]
    %v549 = vld [vmem:[#allocation4 + $0x1c] sm:$0xff]
    %v550 = vld [vmem:[#allocation4 + $0x24] sm:$0xf]
    %v551 = vld [vmem:[#allocation4 + $0x28] sm:$0xff]
    %v552 = vld [vmem:[#allocation4 + $0x30] sm:$0xff]
    %v553 = vld [vmem:[#allocation4 + $0x38] sm:$0xf]
    %v554 = vld [vmem:[#allocation4 + $0x3c] sm:$0xff]
    %v555 = vld [vmem:[#allocation4 + $0x44] sm:$0xff]
    %v556 = vld [vmem:[#allocation4 + $0x4c] sm:$0xf]
    %v557 = vld [vmem:[#allocation4 + $0x50] sm:$0xff]
    %v558 = vld [vmem:[#allocation4 + $0x58] sm:$0xff]
    %v559 = vld [vmem:[#allocation4 + $0x60] sm:$0xf]
    %v560 = vld [vmem:[#allocation4 + $0x64] sm:$0xff]
    %v561 = vld [vmem:[#allocation4 + $0x6c] sm:$0xff]
    %v562 = vld [vmem:[#allocation4 + $0x74] sm:$0xf]
    %v563 = vld [vmem:[#allocation4 + $0x78] sm:$0xff]
    %v564 = vld [vmem:[#allocation4 + $0x80] sm:$0xff]
    %v565 = vld [vmem:[#allocation4 + $0x88] sm:$0xf]
    %v566 = vld [vmem:[#allocation4 + $0x8c] sm:$0xff]
    %v567 = vld [vmem:[#allocation4 + $0x94] sm:$0xff]
    %v568 = vld [vmem:[#allocation4 + $0x9c] sm:$0xf]
    %v569 = vld [vmem:[#allocation4 + $0xa0] sm:$0xff]
    %v570 = vld [vmem:[#allocation4 + $0xa8] sm:$0xff]
    %v571 = vld [vmem:[#allocation4 + $0xb0] sm:$0xf]
    %v572 = vld [vmem:[#allocation4 + $0xb4] sm:$0xff]
    %v573 = vld [vmem:[#allocation4 + $0xbc] sm:$0xff]
    %v574 = vld [vmem:[#allocation4 + $0xc4] sm:$0xf]
    %v575 = vld [vmem:[#allocation4 + $0xc8] sm:$0xff]
    %v576 = vld [vmem:[#allocation4 + $0xd0] sm:$0xff]
    %v577 = vld [vmem:[#allocation4 + $0xd8] sm:$0xf]
    %v578 = vld [vmem:[#allocation4 + $0xdc] sm:$0xff]
    %v579 = vld [vmem:[#allocation4 + $0xe4] sm:$0xff]
    %v580 = vld [vmem:[#allocation4 + $0xec] sm:$0xf]
    %v581 = vld [vmem:[#allocation4 + $0xf0] sm:$0xff]
    %v582 = vld [vmem:[#allocation4 + $0xf8] sm:$0xff]
    %v583 = vld [vmem:[#allocation4 + $0x100] sm:$0xf]
    %v584 = vld [vmem:[#allocation4 + $0x104] sm:$0xff]
    %v585 = vld [vmem:[#allocation4 + $0x10c] sm:$0xff]
    %v586 = vld [vmem:[#allocation4 + $0x114] sm:$0xf]
    %v587 = vld [vmem:[#allocation4 + $0x118] sm:$0xff]
    %v588 = vld [vmem:[#allocation4 + $0x120] sm:$0xff]
    %v589 = vld [vmem:[#allocation4 + $0x128] sm:$0xf]
    %v590 = vld [vmem:[#allocation4 + $0x12c] sm:$0xff]
    %v591 = vld [vmem:[#allocation4 + $0x134] sm:$0xff]
    %v592 = vld [vmem:[#allocation4 + $0x13c] sm:$0xf]
    %v641 = vunpack.c.l.b16 %v545
    %v642 = vunpack.c.h.b16 %v545
    %v643 = vunpack.c.l.b16 %v546
    %v644 = vunpack.c.h.b16 %v546
    %v645 = vunpack.c.l.b16 %v547
    %v646 = vunpack.c.l.b16 %v548
    %v647 = vunpack.c.h.b16 %v548
    %v648 = vunpack.c.l.b16 %v549
    %v649 = vunpack.c.h.b16 %v549
    %v650 = vunpack.c.l.b16 %v550
    %v651 = vunpack.c.l.b16 %v551
    %v652 = vunpack.c.h.b16 %v551
    %v653 = vunpack.c.l.b16 %v552
    %v654 = vunpack.c.h.b16 %v552
    %v655 = vunpack.c.l.b16 %v553
    %v656 = vunpack.c.l.b16 %v554
    %v657 = vunpack.c.h.b16 %v554
    %v658 = vunpack.c.l.b16 %v555
    %v659 = vunpack.c.h.b16 %v555
    %v660 = vunpack.c.l.b16 %v556
    %v661 = vunpack.c.l.b16 %v557
    %v662 = vunpack.c.h.b16 %v557
    %v663 = vunpack.c.l.b16 %v558
    %v664 = vunpack.c.h.b16 %v558
    %v665 = vunpack.c.l.b16 %v559
    %v666 = vunpack.c.l.b16 %v560
    %v667 = vunpack.c.h.b16 %v560
    %v668 = vunpack.c.l.b16 %v561
    %v669 = vunpack.c.h.b16 %v561
    %v670 = vunpack.c.l.b16 %v562
    %v671 = vunpack.c.l.b16 %v563
    %v672 = vunpack.c.h.b16 %v563
    %v673 = vunpack.c.l.b16 %v564
    %v674 = vunpack.c.h.b16 %v564
    %v675 = vunpack.c.l.b16 %v565
    %v676 = vunpack.c.l.b16 %v566
    %v677 = vunpack.c.h.b16 %v566
    %v678 = vunpack.c.l.b16 %v567
    %v679 = vunpack.c.h.b16 %v567
    %v680 = vunpack.c.l.b16 %v568
    %v681 = vunpack.c.l.b16 %v569
    %v682 = vunpack.c.h.b16 %v569
    %v683 = vunpack.c.l.b16 %v570
    %v684 = vunpack.c.h.b16 %v570
    %v685 = vunpack.c.l.b16 %v571
    %v686 = vunpack.c.l.b16 %v572
    %v687 = vunpack.c.h.b16 %v572
    %v688 = vunpack.c.l.b16 %v573
    %v689 = vunpack.c.h.b16 %v573
    %v690 = vunpack.c.l.b16 %v574
    %v691 = vunpack.c.l.b16 %v575
    %v692 = vunpack.c.h.b16 %v575
    %v693 = vunpack.c.l.b16 %v576
    %v694 = vunpack.c.h.b16 %v576
    %v695 = vunpack.c.l.b16 %v577
    %v696 = vunpack.c.l.b16 %v578
    %v697 = vunpack.c.h.b16 %v578
    %v698 = vunpack.c.l.b16 %v579
    %v699 = vunpack.c.h.b16 %v579
    %v700 = vunpack.c.l.b16 %v580
    %v701 = vunpack.c.l.b16 %v581
    %v702 = vunpack.c.h.b16 %v581
    %v703 = vunpack.c.l.b16 %v582
    %v704 = vunpack.c.h.b16 %v582
    %v705 = vunpack.c.l.b16 %v583
    %v706 = vunpack.c.l.b16 %v584
    %v707 = vunpack.c.h.b16 %v584
    %v708 = vunpack.c.l.b16 %v585
    %v709 = vunpack.c.h.b16 %v585
    %v710 = vunpack.c.l.b16 %v586
    %v711 = vunpack.c.l.b16 %v587
    %v712 = vunpack.c.h.b16 %v587
    %v713 = vunpack.c.l.b16 %v588
    %v714 = vunpack.c.h.b16 %v588
    %v715 = vunpack.c.l.b16 %v589
    %v716 = vunpack.c.l.b16 %v590
    %v717 = vunpack.c.h.b16 %v590
    %v718 = vunpack.c.l.b16 %v591
    %v719 = vunpack.c.h.b16 %v591
    %v720 = vunpack.c.l.b16 %v592
    %v721 = vpack.c.b16 %v646, %v641
    %v722 = vpack.c.b16 %v647, %v642
    %v723 = vpack.c.b16 %v648, %v643
    %v724 = vpack.c.b16 %v649, %v644
    %v725 = vpack.c.b16 %v650, %v645
    %v726 = vpack.c.b16 %v656, %v651
    %v727 = vpack.c.b16 %v657, %v652
    %v728 = vpack.c.b16 %v658, %v653
    %v729 = vpack.c.b16 %v659, %v654
    %v730 = vpack.c.b16 %v660, %v655
    %v731 = vpack.c.b16 %v666, %v661
    %v732 = vpack.c.b16 %v667, %v662
    %v733 = vpack.c.b16 %v668, %v663
    %v734 = vpack.c.b16 %v669, %v664
    %v735 = vpack.c.b16 %v670, %v665
    %v736 = vpack.c.b16 %v676, %v671
    %v737 = vpack.c.b16 %v677, %v672
    %v738 = vpack.c.b16 %v678, %v673
    %v739 = vpack.c.b16 %v679, %v674
    %v740 = vpack.c.b16 %v680, %v675
    %v741 = vpack.c.b16 %v686, %v681
    %v742 = vpack.c.b16 %v687, %v682
    %v743 = vpack.c.b16 %v688, %v683
    %v744 = vpack.c.b16 %v689, %v684
    %v745 = vpack.c.b16 %v690, %v685
    %v746 = vpack.c.b16 %v696, %v691
    %v747 = vpack.c.b16 %v697, %v692
    %v748 = vpack.c.b16 %v698, %v693
    %v749 = vpack.c.b16 %v699, %v694
    %v750 = vpack.c.b16 %v700, %v695
    %v751 = vpack.c.b16 %v706, %v701
    %v752 = vpack.c.b16 %v707, %v702
    %v753 = vpack.c.b16 %v708, %v703
    %v754 = vpack.c.b16 %v709, %v704
    %v755 = vpack.c.b16 %v710, %v705
    %v756 = vpack.c.b16 %v716, %v711
    %v757 = vpack.c.b16 %v717, %v712
    %v758 = vpack.c.b16 %v718, %v713
    %v759 = vpack.c.b16 %v719, %v714
    %v760 = vpack.c.b16 %v720, %v715
    %801 = vmatprep.subr.bf16.mxu0 %v722
    %802 = vmatpush1.bf16.msra.mxu0 %v721
    %803 = vmatprep.subr.bf16.mxu0 %v727
    %804 = vmatpush1.bf16.msra.mxu0 %v726
    %805 = vmatprep.subr.bf16.mxu0 %v732
    %806 = vmatpush1.bf16.msra.mxu0 %v731
    %807 = vmatprep.subr.bf16.mxu0 %v737
    %808 = vmatpush1.bf16.msra.mxu0 %v736
    %809 = vmatprep.subr.bf16.mxu0 %v742
    %810 = vmatpush1.bf16.msra.mxu0 %v741
    %811 = vmatprep.subr.bf16.mxu0 %v747
    %812 = vmatpush1.bf16.msra.mxu0 %v746
    %813 = vmatprep.subr.bf16.mxu0 %v752
    %814 = vmatpush1.bf16.msra.mxu0 %v751
    %815 = vmatprep.subr.bf16.mxu0 %v757
    %816 = vmatpush1.bf16.msra.mxu0 %v756
    %817 = vmatprep.subr.bf16.mxu0 0
    %818 = vmatpush1.bf16.msra.mxu0 0
    %819 = vmatprep.subr.bf16.mxu0 0
    %820 = vmatpush1.bf16.msra.mxu0 0
    %821 = vmatprep.subr.bf16.mxu0 0
    %822 = vmatpush1.bf16.msra.mxu0 0
    %823 = vmatprep.subr.bf16.mxu0 0
    %824 = vmatpush1.bf16.msra.mxu0 0
    %825 = vmatprep.subr.bf16.mxu0 0
    %826 = vmatpush1.bf16.msra.mxu0 0
    %827 = vmatprep.subr.bf16.mxu0 0
    %828 = vmatpush1.bf16.msra.mxu0 0
    %829 = vmatprep.subr.bf16.mxu0 0
    %830 = vmatpush1.bf16.msra.mxu0 0
    %831 = vmatprep.subr.bf16.mxu0 0
    %832 = vmatpush1.bf16.msra.mxu0 0
    %833 = vmatprep.mubr.bf16.mxu0 0
    %834 = vmatmul.mubr.bf16.gmra.mrb[0].mxu0 %v178
    %v835 = vpop.f32.mrb[0].mxu0
    %v836 = vadd.f32 %v148, %v835
    %v837 = vpop.f32.mrb[0].mxu0
    %v838 = vadd.f32 %v152, %v837
    %v839 = vpop.f32.mrb[0].mxu0
    %v840 = vadd.f32 %v148, %v839
    %v841 = vpop.f32.mrb[0].mxu0
    %v842 = vadd.f32 %v152, %v841
    %843 = vmatprep.mubr.bf16.mxu0 0
    %844 = vmatmul.mubr.bf16.gmra.mrb[0].mxu0 %v179
    %v845 = vpop.f32.mrb[0].mxu0
    %v846 = vadd.f32 %v148, %v845
    %v847 = vpop.f32.mrb[0].mxu0
    %v848 = vadd.f32 %v152, %v847
    %v849 = vpop.f32.mrb[0].mxu0
    %v850 = vadd.f32 %v148, %v849
    %v851 = vpop.f32.mrb[0].mxu0
    %v852 = vadd.f32 %v152, %v851
    %853 = vdwg.mxu0
    %854 = vmatprep.subr.bf16.mxu0 %v724
    %855 = vmatpush1.bf16.msra.mxu0 %v723
    %856 = vmatprep.subr.bf16.mxu0 %v729
    %857 = vmatpush1.bf16.msra.mxu0 %v728
    %858 = vmatprep.subr.bf16.mxu0 %v734
    %859 = vmatpush1.bf16.msra.mxu0 %v733
    %860 = vmatprep.subr.bf16.mxu0 %v739
    %861 = vmatpush1.bf16.msra.mxu0 %v738
    %862 = vmatprep.subr.bf16.mxu0 %v744
    %863 = vmatpush1.bf16.msra.mxu0 %v743
    %864 = vmatprep.subr.bf16.mxu0 %v749
    %865 = vmatpush1.bf16.msra.mxu0 %v748
    %866 = vmatprep.subr.bf16.mxu0 %v754
    %867 = vmatpush1.bf16.msra.mxu0 %v753
    %868 = vmatprep.subr.bf16.mxu0 %v759
    %869 = vmatpush1.bf16.msra.mxu0 %v758
    %870 = vmatprep.subr.bf16.mxu0 0
    %871 = vmatpush1.bf16.msra.mxu0 0
    %872 = vmatprep.subr.bf16.mxu0 0
    %873 = vmatpush1.bf16.msra.mxu0 0
    %874 = vmatprep.subr.bf16.mxu0 0
    %875 = vmatpush1.bf16.msra.mxu0 0
    %876 = vmatprep.subr.bf16.mxu0 0
    %877 = vmatpush1.bf16.msra.mxu0 0
    %878 = vmatprep.subr.bf16.mxu0 0
    %879 = vmatpush1.bf16.msra.mxu0 0
    %880 = vmatprep.subr.bf16.mxu0 0
    %881 = vmatpush1.bf16.msra.mxu0 0
    %882 = vmatprep.subr.bf16.mxu0 0
    %883 = vmatpush1.bf16.msra.mxu0 0
    %884 = vmatprep.subr.bf16.mxu0 0
    %885 = vmatpush1.bf16.msra.mxu0 0
    %886 = vmatprep.mubr.bf16.mxu0 0
    %887 = vmatmul.mubr.bf16.gmra.mrb[0].mxu0 %v178
    %v888 = vpop.f32.mrb[0].mxu0
    %v889 = vadd.f32 %v156, %v888
    %v890 = vpop.f32.mrb[0].mxu0
    %v891 = vadd.f32 %v160, %v890
    %v892 = vpop.f32.mrb[0].mxu0
    %v893 = vadd.f32 %v156, %v892
    %v894 = vpop.f32.mrb[0].mxu0
    %v895 = vadd.f32 %v160, %v894
    %896 = vmatprep.mubr.bf16.mxu0 0
    %897 = vmatmul.mubr.bf16.gmra.mrb[0].mxu0 %v179
    %v898 = vpop.f32.mrb[0].mxu0
    %v899 = vadd.f32 %v156, %v898
    %v900 = vpop.f32.mrb[0].mxu0
    %v901 = vadd.f32 %v160, %v900
    %v902 = vpop.f32.mrb[0].mxu0
    %v903 = vadd.f32 %v156, %v902
    %v904 = vpop.f32.mrb[0].mxu0
    %v905 = vadd.f32 %v160, %v904
    %906 = vdwg.mxu0
    %907 = vmatprep.subr.bf16.mxu0 0
    %908 = vmatpush1.bf16.msra.mxu0 %v725
    %909 = vmatprep.subr.bf16.mxu0 0
    %910 = vmatpush1.bf16.msra.mxu0 %v730
    %911 = vmatprep.subr.bf16.mxu0 0
    %912 = vmatpush1.bf16.msra.mxu0 %v735
    %913 = vmatprep.subr.bf16.mxu0 0
    %914 = vmatpush1.bf16.msra.mxu0 %v740
    %915 = vmatprep.subr.bf16.mxu0 0
    %916 = vmatpush1.bf16.msra.mxu0 %v745
    %917 = vmatprep.subr.bf16.mxu0 0
    %918 = vmatpush1.bf16.msra.mxu0 %v750
    %919 = vmatprep.subr.bf16.mxu0 0
    %920 = vmatpush1.bf16.msra.mxu0 %v755
    %921 = vmatprep.subr.bf16.mxu0 0
    %922 = vmatpush1.bf16.msra.mxu0 %v760
    %923 = vmatprep.subr.bf16.mxu0 0
    %924 = vmatpush1.bf16.msra.mxu0 0
    %925 = vmatprep.subr.bf16.mxu0 0
    %926 = vmatpush1.bf16.msra.mxu0 0
    %927 = vmatprep.subr.bf16.mxu0 0
    %928 = vmatpush1.bf16.msra.mxu0 0
    %929 = vmatprep.subr.bf16.mxu0 0
    %930 = vmatpush1.bf16.msra.mxu0 0
    %931 = vmatprep.subr.bf16.mxu0 0
    %932 = vmatpush1.bf16.msra.mxu0 0
    %933 = vmatprep.subr.bf16.mxu0 0
    %934 = vmatpush1.bf16.msra.mxu0 0
    %935 = vmatprep.subr.bf16.mxu0 0
    %936 = vmatpush1.bf16.msra.mxu0 0
    %937 = vmatprep.subr.bf16.mxu0 0
    %938 = vmatpush1.bf16.msra.mxu0 0
    %939 = vmatprep.mubr.bf16.mxu0 0
    %940 = vmatmul.mubr.bf16.gmra.mrb[0].mxu0 %v178
    %v941 = vpop.f32.mrb[0].mxu0
    %v942 = vadd.f32 %v164, %v941
    %v943 = vpop.f32.mrb[0].mxu0
    %v944 = vpop.f32.mrb[0].mxu0
    %v945 = vadd.f32 %v164, %v944
    %v946 = vpop.f32.mrb[0].mxu0
    %947 = vmatprep.mubr.bf16.mxu0 0
    %948 = vmatmul.mubr.bf16.gmra.mrb[0].mxu0 %v179
    %v949 = vpop.f32.mrb[0].mxu0
    %v950 = vadd.f32 %v164, %v949
    %v951 = vpop.f32.mrb[0].mxu0
    %v952 = vpop.f32.mrb[0].mxu0
    %v953 = vadd.f32 %v164, %v952
    %v954 = vpop.f32.mrb[0].mxu0
    %955 = vdwg.mxu0
    %v956 = vmax.f32 %v425, 0.0
    %v957 = vmax.f32 %v427, 0.0
    %v958 = vmax.f32 %v478, 0.0
    %v959 = vmax.f32 %v480, 0.0
    %v960 = vmax.f32 %v531, 0.0
    %v961 = vmax.f32 %v429, 0.0
    %v962 = vmax.f32 %v431, 0.0
    %v963 = vmax.f32 %v482, 0.0
    %v964 = vmax.f32 %v484, 0.0
    %v965 = vmax.f32 %v534, 0.0
    %v966 = vmax.f32 %v435, 0.0
    %v967 = vmax.f32 %v437, 0.0
    %v968 = vmax.f32 %v488, 0.0
    %v969 = vmax.f32 %v490, 0.0
    %v970 = vmax.f32 %v539, 0.0
    %v971 = vmax.f32 %v439, 0.0
    %v972 = vmax.f32 %v441, 0.0
    %v973 = vmax.f32 %v492, 0.0
    %v974 = vmax.f32 %v494, 0.0
    %v975 = vmax.f32 %v542, 0.0
    %v976 = vmax.f32 %v836, 0.0
    %v977 = vmax.f32 %v838, 0.0
    %v978 = vmax.f32 %v889, 0.0
    %v979 = vmax.f32 %v891, 0.0
    %v980 = vmax.f32 %v942, 0.0
    %v981 = vmax.f32 %v840, 0.0
    %v982 = vmax.f32 %v842, 0.0
    %v983 = vmax.f32 %v893, 0.0
    %v984 = vmax.f32 %v895, 0.0
    %v985 = vmax.f32 %v945, 0.0
    %v986 = vmax.f32 %v846, 0.0
    %v987 = vmax.f32 %v848, 0.0
    %v988 = vmax.f32 %v899, 0.0
    %v989 = vmax.f32 %v901, 0.0
    %v990 = vmax.f32 %v950, 0.0
    %v991 = vmax.f32 %v850, 0.0
    %v992 = vmax.f32 %v852, 0.0
    %v993 = vmax.f32 %v903, 0.0
    %v994 = vmax.f32 %v905, 0.0
    %v995 = vmax.f32 %v953, 0.0
    %v996 = vmax.f32 %v956, %v976
    %v997 = vmax.f32 %v957, %v977
    %v998 = vmax.f32 %v958, %v978
    %v999 = vmax.f32 %v959, %v979
    %v1000 = vmax.f32 %v960, %v980
    %v1001 = vmax.f32 %v961, %v981
    %v1002 = vmax.f32 %v962, %v982
    %v1003 = vmax.f32 %v963, %v983
    %v1004 = vmax.f32 %v964, %v984
    %v1005 = vmax.f32 %v965, %v985
    %v1006 = vmax.f32 %v966, %v986
    %v1007 = vmax.f32 %v967, %v987
    %v1008 = vmax.f32 %v968, %v988
    %v1009 = vmax.f32 %v969, %v989
    %v1010 = vmax.f32 %v970, %v990
    %v1011 = vmax.f32 %v971, %v991
    %v1012 = vmax.f32 %v972, %v992
    %v1013 = vmax.f32 %v973, %v993
    %v1014 = vmax.f32 %v974, %v994
    %v1015 = vmax.f32 %v975, %v995
    %v1016 = vpack.c.bf16 %v1001, %v996
    %v1017 = vpack.c.bf16 %v1002, %v997
    %v1018 = vpack.c.bf16 %v1003, %v998
    %v1019 = vpack.c.bf16 %v1004, %v999
    %v1020 = vpack.c.bf16 %v1005, %v1000
    %v1021 = vpack.c.bf16 %v1011, %v1006
    %v1022 = vpack.c.bf16 %v1012, %v1007
    %v1023 = vpack.c.bf16 %v1013, %v1008
    %v1024 = vpack.c.bf16 %v1014, %v1009
    %v1025 = vpack.c.bf16 %v1015, %v1010
    %v1026 = vld [vmem:[#allocation6] sm:$0xf]
    %v1027 = vld [vmem:[#allocation6 + $0x4] sm:$0xf]
    %v1028 = vld [vmem:[#allocation6 + $0x8] sm:$0xf]
    %v1029 = vld [vmem:[#allocation6 + $0xc] sm:$0xf]
    %v1030 = vld [vmem:[#allocation6 + $0x10] sm:$0xf]
    %v1031 = vld [vmem:[#allocation6 + $0x14] sm:$0xf]
    %v1032 = vld [vmem:[#allocation6 + $0x18] sm:$0xf]
    %v1033 = vld [vmem:[#allocation6 + $0x1c] sm:$0xf]
    %v1034 = vld [vmem:[#allocation6 + $0x20] sm:$0xf]
    %v1035 = vld [vmem:[#allocation6 + $0x24] sm:$0xf]
    %v1036 = vld [vmem:[#allocation6 + $0x28] sm:$0xf]
    %v1037 = vld [vmem:[#allocation6 + $0x2c] sm:$0xf]
    %v1038 = vld [vmem:[#allocation6 + $0x30] sm:$0xf]
    %v1039 = vld [vmem:[#allocation6 + $0x34] sm:$0xf]
    %v1040 = vld [vmem:[#allocation6 + $0x38] sm:$0xf]
    %v1041 = vld [vmem:[#allocation6 + $0x3c] sm:$0xf]
    %v1042 = vld [vmem:[#allocation6 + $0x40] sm:$0xf]
    %v1043 = vld [vmem:[#allocation6 + $0x44] sm:$0xf]
    %v1044 = vld [vmem:[#allocation6 + $0x48] sm:$0xf]
    %v1045 = vld [vmem:[#allocation6 + $0x4c] sm:$0xf]
    %v1046 = vld [vmem:[#allocation6 + $0x50] sm:$0xf]
    %v1047 = vld [vmem:[#allocation6 + $0x54] sm:$0xf]
    %v1048 = vld [vmem:[#allocation6 + $0x58] sm:$0xf]
    %v1049 = vld [vmem:[#allocation6 + $0x5c] sm:$0xf]
    %v1050 = vld [vmem:[#allocation6 + $0x60] sm:$0xf]
    %v1051 = vld [vmem:[#allocation6 + $0x64] sm:$0xf]
    %v1052 = vld [vmem:[#allocation6 + $0x68] sm:$0xf]
    %v1053 = vld [vmem:[#allocation6 + $0x6c] sm:$0xf]
    %v1054 = vld [vmem:[#allocation6 + $0x70] sm:$0xf]
    %v1055 = vld [vmem:[#allocation6 + $0x74] sm:$0xf]
    %v1056 = vld [vmem:[#allocation6 + $0x78] sm:$0xf]
    %v1057 = vld [vmem:[#allocation6 + $0x7c] sm:$0xf]
    %v1058 = vld [vmem:[#allocation6 + $0x80] sm:$0xf]
    %v1059 = vld [vmem:[#allocation6 + $0x84] sm:$0xf]
    %v1060 = vld [vmem:[#allocation6 + $0x88] sm:$0xf]
    %v1061 = vld [vmem:[#allocation6 + $0x8c] sm:$0xf]
    %v1062 = vld [vmem:[#allocation6 + $0x90] sm:$0xf]
    %v1063 = vld [vmem:[#allocation6 + $0x94] sm:$0xf]
    %v1064 = vld [vmem:[#allocation6 + $0x98] sm:$0xf]
    %v1065 = vld [vmem:[#allocation6 + $0x9c] sm:$0xf]
    %v1066 = vld [vmem:[#allocation6 + $0xa0] sm:$0xf]
    %v1067 = vld [vmem:[#allocation6 + $0xa4] sm:$0xf]
    %v1068 = vld [vmem:[#allocation6 + $0xa8] sm:$0xf]
    %v1069 = vld [vmem:[#allocation6 + $0xac] sm:$0xf]
    %v1070 = vld [vmem:[#allocation6 + $0xb0] sm:$0xf]
    %v1071 = vld [vmem:[#allocation6 + $0xb4] sm:$0xf]
    %v1072 = vld [vmem:[#allocation6 + $0xb8] sm:$0xf]
    %v1073 = vld [vmem:[#allocation6 + $0xbc] sm:$0xf]
    %v1074 = vld [vmem:[#allocation6 + $0xc0] sm:$0xf]
    %v1075 = vld [vmem:[#allocation6 + $0xc4] sm:$0xf]
    %v1076 = vld [vmem:[#allocation6 + $0xc8] sm:$0xf]
    %v1077 = vld [vmem:[#allocation6 + $0xcc] sm:$0xf]
    %v1078 = vld [vmem:[#allocation6 + $0xd0] sm:$0xf]
    %v1079 = vld [vmem:[#allocation6 + $0xd4] sm:$0xf]
    %v1080 = vld [vmem:[#allocation6 + $0xd8] sm:$0xf]
    %v1081 = vld [vmem:[#allocation6 + $0xdc] sm:$0xf]
    %v1082 = vld [vmem:[#allocation6 + $0xe0] sm:$0xf]
    %v1083 = vld [vmem:[#allocation6 + $0xe4] sm:$0xf]
    %v1084 = vld [vmem:[#allocation6 + $0xe8] sm:$0xf]
    %v1085 = vld [vmem:[#allocation6 + $0xec] sm:$0xf]
    %v1086 = vld [vmem:[#allocation6 + $0xf0] sm:$0xf]
    %v1087 = vld [vmem:[#allocation6 + $0xf4] sm:$0xf]
    %v1088 = vld [vmem:[#allocation6 + $0xf8] sm:$0xf]
    %v1089 = vld [vmem:[#allocation6 + $0xfc] sm:$0xf]
    %v1090 = vld [vmem:[#allocation6 + $0x100] sm:$0xf]
    %v1091 = vld [vmem:[#allocation6 + $0x104] sm:$0xf]
    %v1092 = vld [vmem:[#allocation6 + $0x108] sm:$0xf]
    %v1093 = vld [vmem:[#allocation6 + $0x10c] sm:$0xf]
    %v1094 = vld [vmem:[#allocation6 + $0x110] sm:$0xf]
    %v1095 = vld [vmem:[#allocation6 + $0x114] sm:$0xf]
    %v1096 = vld [vmem:[#allocation6 + $0x118] sm:$0xf]
    %v1097 = vld [vmem:[#allocation6 + $0x11c] sm:$0xf]
    %v1098 = vld [vmem:[#allocation6 + $0x120] sm:$0xf]
    %v1099 = vld [vmem:[#allocation6 + $0x124] sm:$0xf]
    %v1100 = vld [vmem:[#allocation6 + $0x128] sm:$0xf]
    %v1101 = vld [vmem:[#allocation6 + $0x12c] sm:$0xf]
    %v1102 = vld [vmem:[#allocation6 + $0x130] sm:$0xf]
    %v1103 = vld [vmem:[#allocation6 + $0x134] sm:$0xf]
    %v1104 = vld [vmem:[#allocation6 + $0x138] sm:$0xf]
    %v1105 = vld [vmem:[#allocation6 + $0x13c] sm:$0xf]
    %v1106 = vld [vmem:[%s5] sm:$0x1]
    %v1108 = vlaneseq
    %v1109 = vshrl.u32 %v1108, 7
    %v1110 = vsub.s32 0, %v1109
    %v1111 = vrot.slane %v1106, %v1110
    %v1193 = vunpack.c.l.b16 %v1026
    %v1194 = vunpack.c.l.b16 %v1027
    %v1195 = vunpack.c.l.b16 %v1028
    %v1196 = vunpack.c.l.b16 %v1029
    %v1197 = vunpack.c.l.b16 %v1030
    %v1198 = vunpack.c.l.b16 %v1031
    %v1199 = vunpack.c.l.b16 %v1032
    %v1200 = vunpack.c.l.b16 %v1033
    %v1201 = vunpack.c.l.b16 %v1034
    %v1202 = vunpack.c.l.b16 %v1035
    %v1203 = vunpack.c.l.b16 %v1036
    %v1204 = vunpack.c.l.b16 %v1037
    %v1205 = vunpack.c.l.b16 %v1038
    %v1206 = vunpack.c.l.b16 %v1039
    %v1207 = vunpack.c.l.b16 %v1040
    %v1208 = vunpack.c.l.b16 %v1041
    %v1209 = vunpack.c.l.b16 %v1042
    %v1210 = vunpack.c.l.b16 %v1043
    %v1211 = vunpack.c.l.b16 %v1044
    %v1212 = vunpack.c.l.b16 %v1045
    %v1213 = vunpack.c.l.b16 %v1046
    %v1214 = vunpack.c.l.b16 %v1047
    %v1215 = vunpack.c.l.b16 %v1048
    %v1216 = vunpack.c.l.b16 %v1049
    %v1217 = vunpack.c.l.b16 %v1050
    %v1218 = vunpack.c.l.b16 %v1051
    %v1219 = vunpack.c.l.b16 %v1052
    %v1220 = vunpack.c.l.b16 %v1053
    %v1221 = vunpack.c.l.b16 %v1054
    %v1222 = vunpack.c.l.b16 %v1055
    %v1223 = vunpack.c.l.b16 %v1056
    %v1224 = vunpack.c.l.b16 %v1057
    %v1225 = vunpack.c.l.b16 %v1058
    %v1226 = vunpack.c.l.b16 %v1059
    %v1227 = vunpack.c.l.b16 %v1060
    %v1228 = vunpack.c.l.b16 %v1061
    %v1229 = vunpack.c.l.b16 %v1062
    %v1230 = vunpack.c.l.b16 %v1063
    %v1231 = vunpack.c.l.b16 %v1064
    %v1232 = vunpack.c.l.b16 %v1065
    %v1233 = vunpack.c.l.b16 %v1066
    %v1234 = vunpack.c.l.b16 %v1067
    %v1235 = vunpack.c.l.b16 %v1068
    %v1236 = vunpack.c.l.b16 %v1069
    %v1237 = vunpack.c.l.b16 %v1070
    %v1238 = vunpack.c.l.b16 %v1071
    %v1239 = vunpack.c.l.b16 %v1072
    %v1240 = vunpack.c.l.b16 %v1073
    %v1241 = vunpack.c.l.b16 %v1074
    %v1242 = vunpack.c.l.b16 %v1075
    %v1243 = vunpack.c.l.b16 %v1076
    %v1244 = vunpack.c.l.b16 %v1077
    %v1245 = vunpack.c.l.b16 %v1078
    %v1246 = vunpack.c.l.b16 %v1079
    %v1247 = vunpack.c.l.b16 %v1080
    %v1248 = vunpack.c.l.b16 %v1081
    %v1249 = vunpack.c.l.b16 %v1082
    %v1250 = vunpack.c.l.b16 %v1083
    %v1251 = vunpack.c.l.b16 %v1084
    %v1252 = vunpack.c.l.b16 %v1085
    %v1253 = vunpack.c.l.b16 %v1086
    %v1254 = vunpack.c.l.b16 %v1087
    %v1255 = vunpack.c.l.b16 %v1088
    %v1256 = vunpack.c.l.b16 %v1089
    %v1257 = vunpack.c.l.b16 %v1090
    %v1258 = vunpack.c.l.b16 %v1091
    %v1259 = vunpack.c.l.b16 %v1092
    %v1260 = vunpack.c.l.b16 %v1093
    %v1261 = vunpack.c.l.b16 %v1094
    %v1262 = vunpack.c.l.b16 %v1095
    %v1263 = vunpack.c.l.b16 %v1096
    %v1264 = vunpack.c.l.b16 %v1097
    %v1265 = vunpack.c.l.b16 %v1098
    %v1266 = vunpack.c.l.b16 %v1099
    %v1267 = vunpack.c.l.b16 %v1100
    %v1268 = vunpack.c.l.b16 %v1101
    %v1269 = vunpack.c.l.b16 %v1102
    %v1270 = vunpack.c.l.b16 %v1103
    %v1271 = vunpack.c.l.b16 %v1104
    %v1272 = vunpack.c.l.b16 %v1105
    %v1273 = vpack.c.b16 %v1194, %v1193
    %v1274 = vpack.c.b16 %v1196, %v1195
    %v1275 = vpack.c.b16 %v1198, %v1197
    %v1276 = vpack.c.b16 %v1200, %v1199
    %v1277 = vpack.c.b16 %v1202, %v1201
    %v1278 = vpack.c.b16 %v1204, %v1203
    %v1279 = vpack.c.b16 %v1206, %v1205
    %v1280 = vpack.c.b16 %v1208, %v1207
    %v1281 = vpack.c.b16 %v1210, %v1209
    %v1282 = vpack.c.b16 %v1212, %v1211
    %v1283 = vpack.c.b16 %v1214, %v1213
    %v1284 = vpack.c.b16 %v1216, %v1215
    %v1285 = vpack.c.b16 %v1218, %v1217
    %v1286 = vpack.c.b16 %v1220, %v1219
    %v1287 = vpack.c.b16 %v1222, %v1221
    %v1288 = vpack.c.b16 %v1224, %v1223
    %v1289 = vpack.c.b16 %v1226, %v1225
    %v1290 = vpack.c.b16 %v1228, %v1227
    %v1291 = vpack.c.b16 %v1230, %v1229
    %v1292 = vpack.c.b16 %v1232, %v1231
    %v1293 = vpack.c.b16 %v1234, %v1233
    %v1294 = vpack.c.b16 %v1236, %v1235
    %v1295 = vpack.c.b16 %v1238, %v1237
    %v1296 = vpack.c.b16 %v1240, %v1239
    %v1297 = vpack.c.b16 %v1242, %v1241
    %v1298 = vpack.c.b16 %v1244, %v1243
    %v1299 = vpack.c.b16 %v1246, %v1245
    %v1300 = vpack.c.b16 %v1248, %v1247
    %v1301 = vpack.c.b16 %v1250, %v1249
    %v1302 = vpack.c.b16 %v1252, %v1251
    %v1303 = vpack.c.b16 %v1254, %v1253
    %v1304 = vpack.c.b16 %v1256, %v1255
    %v1305 = vpack.c.b16 %v1258, %v1257
    %v1306 = vpack.c.b16 %v1260, %v1259
    %v1307 = vpack.c.b16 %v1262, %v1261
    %v1308 = vpack.c.b16 %v1264, %v1263
    %v1309 = vpack.c.b16 %v1266, %v1265
    %v1310 = vpack.c.b16 %v1268, %v1267
    %v1311 = vpack.c.b16 %v1270, %v1269
    %v1312 = vpack.c.b16 %v1272, %v1271
    %1353 = vmatprep.subr.bf16.mxu0 0
    %1354 = vmatpush1.bf16.msra.mxu0 %v1273
    %1355 = vmatprep.subr.bf16.mxu0 0
    %1356 = vmatpush1.bf16.msra.mxu0 %v1274
    %1357 = vmatprep.subr.bf16.mxu0 0
    %1358 = vmatpush1.bf16.msra.mxu0 %v1275
    %1359 = vmatprep.subr.bf16.mxu0 0
    %1360 = vmatpush1.bf16.msra.mxu0 %v1276
    %1361 = vmatprep.subr.bf16.mxu0 0
    %1362 = vmatpush1.bf16.msra.mxu0 %v1277
    %1363 = vmatprep.subr.bf16.mxu0 0
    %1364 = vmatpush1.bf16.msra.mxu0 %v1278
    %1365 = vmatprep.subr.bf16.mxu0 0
    %1366 = vmatpush1.bf16.msra.mxu0 %v1279
    %1367 = vmatprep.subr.bf16.mxu0 0
    %1368 = vmatpush1.bf16.msra.mxu0 %v1280
    %1369 = vmatprep.subr.bf16.mxu0 0
    %1370 = vmatpush1.bf16.msra.mxu0 %v1281
    %1371 = vmatprep.subr.bf16.mxu0 0
    %1372 = vmatpush1.bf16.msra.mxu0 %v1282
    %1373 = vmatprep.subr.bf16.mxu0 0
    %1374 = vmatpush1.bf16.msra.mxu0 %v1283
    %1375 = vmatprep.subr.bf16.mxu0 0
    %1376 = vmatpush1.bf16.msra.mxu0 %v1284
    %1377 = vmatprep.subr.bf16.mxu0 0
    %1378 = vmatpush1.bf16.msra.mxu0 %v1285
    %1379 = vmatprep.subr.bf16.mxu0 0
    %1380 = vmatpush1.bf16.msra.mxu0 %v1286
    %1381 = vmatprep.subr.bf16.mxu0 0
    %1382 = vmatpush1.bf16.msra.mxu0 %v1287
    %1383 = vmatprep.subr.bf16.mxu0 0
    %1384 = vmatpush1.bf16.msra.mxu0 %v1288
    %1385 = vmatprep.mubr.bf16.mxu0 %v1017
    %1386 = vmatmul.mubr.bf16.gmra.mrb[0].mxu0 %v1016
    %v1387 = vpop.f32.mrb[0].mxu0
    %v1388 = vadd.f32 %v1111, %v1387
    %v1389 = vpop.f32.mrb[0].mxu0
    %v1390 = vpop.f32.mrb[0].mxu0
    %v1391 = vadd.f32 %v1111, %v1390
    %v1392 = vpop.f32.mrb[0].mxu0
    %1393 = vmatprep.mubr.bf16.mxu0 %v1022
    %1394 = vmatmul.mubr.bf16.gmra.mrb[0].mxu0 %v1021
    %v1395 = vpop.f32.mrb[0].mxu0
    %v1396 = vadd.f32 %v1111, %v1395
    %v1397 = vpop.f32.mrb[0].mxu0
    %v1398 = vpop.f32.mrb[0].mxu0
    %v1399 = vadd.f32 %v1111, %v1398
    %v1400 = vpop.f32.mrb[0].mxu0
    %1401 = vdwg.mxu0
    %1402 = vmatprep.subr.bf16.mxu0 0
    %1403 = vmatpush1.bf16.msra.mxu0 %v1289
    %1404 = vmatprep.subr.bf16.mxu0 0
    %1405 = vmatpush1.bf16.msra.mxu0 %v1290
    %1406 = vmatprep.subr.bf16.mxu0 0
    %1407 = vmatpush1.bf16.msra.mxu0 %v1291
    %1408 = vmatprep.subr.bf16.mxu0 0
    %1409 = vmatpush1.bf16.msra.mxu0 %v1292
    %1410 = vmatprep.subr.bf16.mxu0 0
    %1411 = vmatpush1.bf16.msra.mxu0 %v1293
    %1412 = vmatprep.subr.bf16.mxu0 0
    %1413 = vmatpush1.bf16.msra.mxu0 %v1294
    %1414 = vmatprep.subr.bf16.mxu0 0
    %1415 = vmatpush1.bf16.msra.mxu0 %v1295
    %1416 = vmatprep.subr.bf16.mxu0 0
    %1417 = vmatpush1.bf16.msra.mxu0 %v1296
    %1418 = vmatprep.subr.bf16.mxu0 0
    %1419 = vmatpush1.bf16.msra.mxu0 %v1297
    %1420 = vmatprep.subr.bf16.mxu0 0
    %1421 = vmatpush1.bf16.msra.mxu0 %v1298
    %1422 = vmatprep.subr.bf16.mxu0 0
    %1423 = vmatpush1.bf16.msra.mxu0 %v1299
    %1424 = vmatprep.subr.bf16.mxu0 0
    %1425 = vmatpush1.bf16.msra.mxu0 %v1300
    %1426 = vmatprep.subr.bf16.mxu0 0
    %1427 = vmatpush1.bf16.msra.mxu0 %v1301
    %1428 = vmatprep.subr.bf16.mxu0 0
    %1429 = vmatpush1.bf16.msra.mxu0 %v1302
    %1430 = vmatprep.subr.bf16.mxu0 0
    %1431 = vmatpush1.bf16.msra.mxu0 %v1303
    %1432 = vmatprep.subr.bf16.mxu0 0
    %1433 = vmatpush1.bf16.msra.mxu0 %v1304
    %1434 = vmatprep.mubr.bf16.mxu0 %v1019
    %1435 = vmatmul.mubr.bf16.gmra.mrb[0].mxu0 %v1018
    %v1436 = vpop.f32.mrb[0].mxu0
    %v1437 = vadd.f32 %v1388, %v1436
    %v1438 = vpop.f32.mrb[0].mxu0
    %v1439 = vpop.f32.mrb[0].mxu0
    %v1440 = vadd.f32 %v1391, %v1439
    %v1441 = vpop.f32.mrb[0].mxu0
    %1442 = vmatprep.mubr.bf16.mxu0 %v1024
    %1443 = vmatmul.mubr.bf16.gmra.mrb[0].mxu0 %v1023
    %v1444 = vpop.f32.mrb[0].mxu0
    %v1445 = vadd.f32 %v1396, %v1444
    %v1446 = vpop.f32.mrb[0].mxu0
    %v1447 = vpop.f32.mrb[0].mxu0
    %v1448 = vadd.f32 %v1399, %v1447
    %v1449 = vpop.f32.mrb[0].mxu0
    %1450 = vdwg.mxu0
    %1451 = vmatprep.subr.bf16.mxu0 0
    %1452 = vmatpush1.bf16.msra.mxu0 %v1305
    %1453 = vmatprep.subr.bf16.mxu0 0
    %1454 = vmatpush1.bf16.msra.mxu0 %v1306
    %1455 = vmatprep.subr.bf16.mxu0 0
    %1456 = vmatpush1.bf16.msra.mxu0 %v1307
    %1457 = vmatprep.subr.bf16.mxu0 0
    %1458 = vmatpush1.bf16.msra.mxu0 %v1308
    %1459 = vmatprep.subr.bf16.mxu0 0
    %1460 = vmatpush1.bf16.msra.mxu0 %v1309
    %1461 = vmatprep.subr.bf16.mxu0 0
    %1462 = vmatpush1.bf16.msra.mxu0 %v1310
    %1463 = vmatprep.subr.bf16.mxu0 0
    %1464 = vmatpush1.bf16.msra.mxu0 %v1311
    %1465 = vmatprep.subr.bf16.mxu0 0
    %1466 = vmatpush1.bf16.msra.mxu0 %v1312
    %1467 = vmatprep.subr.bf16.mxu0 0
    %1468 = vmatpush1.bf16.msra.mxu0 0
    %1469 = vmatprep.subr.bf16.mxu0 0
    %1470 = vmatpush1.bf16.msra.mxu0 0
    %1471 = vmatprep.subr.bf16.mxu0 0
    %1472 = vmatpush1.bf16.msra.mxu0 0
    %1473 = vmatprep.subr.bf16.mxu0 0
    %1474 = vmatpush1.bf16.msra.mxu0 0
    %1475 = vmatprep.subr.bf16.mxu0 0
    %1476 = vmatpush1.bf16.msra.mxu0 0
    %1477 = vmatprep.subr.bf16.mxu0 0
    %1478 = vmatpush1.bf16.msra.mxu0 0
    %1479 = vmatprep.subr.bf16.mxu0 0
    %1480 = vmatpush1.bf16.msra.mxu0 0
    %1481 = vmatprep.subr.bf16.mxu0 0
    %1482 = vmatpush1.bf16.msra.mxu0 0
    %1483 = vmatprep.mubr.bf16.mxu0 0
    %1484 = vmatmul.mubr.bf16.gmra.mrb[0].mxu0 %v1020
    %v1485 = vpop.f32.mrb[0].mxu0
    %v1486 = vadd.f32 %v1437, %v1485
    %v1487 = vpop.f32.mrb[0].mxu0
    %v1488 = vpop.f32.mrb[0].mxu0
    %v1489 = vadd.f32 %v1440, %v1488
    %v1490 = vpop.f32.mrb[0].mxu0
    %1491 = vmatprep.mubr.bf16.mxu0 0
    %1492 = vmatmul.mubr.bf16.gmra.mrb[0].mxu0 %v1025
    %v1493 = vpop.f32.mrb[0].mxu0
    %v1494 = vadd.f32 %v1445, %v1493
    %v1495 = vpop.f32.mrb[0].mxu0
    %v1496 = vpop.f32.mrb[0].mxu0
    %v1497 = vadd.f32 %v1448, %v1496
    %v1498 = vpop.f32.mrb[0].mxu0
    %1499 = vdwg.mxu0
    %v1500 = vtanh.pop %v1486
    %v1501 = vtanh.pop %v1489
    %v1502 = vtanh.pop %v1494
    %v1503 = vtanh.pop %v1497
    %v1504 = vpack.c.bf16 %v1501, %v1500
    %v1505 = vpack.c.bf16 %v1503, %v1502
    %v1506 = vld [vmem:[%s6] sm:$0xf]
    %v1507 = vld [vmem:[%s6 + $0x4] sm:$0xf]
    %v1508 = vld [vmem:[%s6 + $0x8] sm:$0xf]
    %v1509 = vld [vmem:[%s6 + $0xc] sm:$0xf]
    %v1510 = vld [vmem:[%s6 + $0x10] sm:$0xf]
    %v1511 = vld [vmem:[%s6 + $0x14] sm:$0xf]
    %v1512 = vld [vmem:[%s6 + $0x18] sm:$0xf]
    %v1513 = vld [vmem:[%s6 + $0x1c] sm:$0xf]
    %v1514 = vld [vmem:[%s6 + $0x20] sm:$0xf]
    %v1515 = vld [vmem:[%s6 + $0x24] sm:$0xf]
    %v1516 = vld [vmem:[%s6 + $0x28] sm:$0xf]
    %v1517 = vld [vmem:[%s6 + $0x2c] sm:$0xf]
    %v1518 = vld [vmem:[%s6 + $0x30] sm:$0xf]
    %v1519 = vld [vmem:[%s6 + $0x34] sm:$0xf]
    %v1520 = vld [vmem:[%s6 + $0x38] sm:$0xf]
    %v1521 = vld [vmem:[%s6 + $0x3c] sm:$0xf]
    %v1522 = vld [vmem:[%s7] sm:$0x1]
    %v1524 = vlaneseq
    %v1525 = vshrl.u32 %v1524, 7
    %v1526 = vsub.s32 0, %v1525
    %v1527 = vrot.slane %v1522, %v1526
    %v1545 = vunpack.c.l.b16 %v1506
    %v1546 = vunpack.c.l.b16 %v1507
    %v1547 = vunpack.c.l.b16 %v1508
    %v1548 = vunpack.c.l.b16 %v1509
    %v1549 = vunpack.c.l.b16 %v1510
    %v1550 = vunpack.c.l.b16 %v1511
    %v1551 = vunpack.c.l.b16 %v1512
    %v1552 = vunpack.c.l.b16 %v1513
    %v1553 = vunpack.c.l.b16 %v1514
    %v1554 = vunpack.c.l.b16 %v1515
    %v1555 = vunpack.c.l.b16 %v1516
    %v1556 = vunpack.c.l.b16 %v1517
    %v1557 = vunpack.c.l.b16 %v1518
    %v1558 = vunpack.c.l.b16 %v1519
    %v1559 = vunpack.c.l.b16 %v1520
    %v1560 = vunpack.c.l.b16 %v1521
    %v1561 = vpack.c.b16 %v1546, %v1545
    %v1562 = vpack.c.b16 %v1548, %v1547
    %v1563 = vpack.c.b16 %v1550, %v1549
    %v1564 = vpack.c.b16 %v1552, %v1551
    %v1565 = vpack.c.b16 %v1554, %v1553
    %v1566 = vpack.c.b16 %v1556, %v1555
    %v1567 = vpack.c.b16 %v1558, %v1557
    %v1568 = vpack.c.b16 %v1560, %v1559
    %1577 = vmatprep.subr.bf16.mxu0 0
    %1578 = vmatpush1.bf16.msra.mxu0 %v1561
    %1579 = vmatprep.subr.bf16.mxu0 0
    %1580 = vmatpush1.bf16.msra.mxu0 %v1562
    %1581 = vmatprep.subr.bf16.mxu0 0
    %1582 = vmatpush1.bf16.msra.mxu0 %v1563
    %1583 = vmatprep.subr.bf16.mxu0 0
    %1584 = vmatpush1.bf16.msra.mxu0 %v1564
    %1585 = vmatprep.subr.bf16.mxu0 0
    %1586 = vmatpush1.bf16.msra.mxu0 %v1565
    %1587 = vmatprep.subr.bf16.mxu0 0
    %1588 = vmatpush1.bf16.msra.mxu0 %v1566
    %1589 = vmatprep.subr.bf16.mxu0 0
    %1590 = vmatpush1.bf16.msra.mxu0 %v1567
    %1591 = vmatprep.subr.bf16.mxu0 0
    %1592 = vmatpush1.bf16.msra.mxu0 %v1568
    %1593 = vmatprep.subr.bf16.mxu0 0
    %1594 = vmatpush1.bf16.msra.mxu0 0
    %1595 = vmatprep.subr.bf16.mxu0 0
    %1596 = vmatpush1.bf16.msra.mxu0 0
    %1597 = vmatprep.subr.bf16.mxu0 0
    %1598 = vmatpush1.bf16.msra.mxu0 0
    %1599 = vmatprep.subr.bf16.mxu0 0
    %1600 = vmatpush1.bf16.msra.mxu0 0
    %1601 = vmatprep.subr.bf16.mxu0 0
    %1602 = vmatpush1.bf16.msra.mxu0 0
    %1603 = vmatprep.subr.bf16.mxu0 0
    %1604 = vmatpush1.bf16.msra.mxu0 0
    %1605 = vmatprep.subr.bf16.mxu0 0
    %1606 = vmatpush1.bf16.msra.mxu0 0
    %1607 = vmatprep.subr.bf16.mxu0 0
    %1608 = vmatpush1.bf16.msra.mxu0 0
    %1609 = vmatprep.mubr.bf16.mxu0 0
    %1610 = vmatmul.mubr.bf16.gmra.mrb[0].mxu0 %v1504
    %v1611 = vpop.f32.mrb[0].mxu0
    %v1612 = vadd.f32 %v1527, %v1611
    %v1613 = vpop.f32.mrb[0].mxu0
    %v1614 = vpop.f32.mrb[0].mxu0
    %v1615 = vadd.f32 %v1527, %v1614
    %v1616 = vpop.f32.mrb[0].mxu0
    %1617 = vmatprep.mubr.bf16.mxu0 0
    %1618 = vmatmul.mubr.bf16.gmra.mrb[0].mxu0 %v1505
    %v1619 = vpop.f32.mrb[0].mxu0
    %v1620 = vadd.f32 %v1527, %v1619
    %v1621 = vpop.f32.mrb[0].mxu0
    %v1622 = vpop.f32.mrb[0].mxu0
    %v1623 = vadd.f32 %v1527, %v1622
    %v1624 = vpop.f32.mrb[0].mxu0
    %1625 = vdwg.mxu0
    %v1626 = vmax.f32 %v1612, 0.0
    %v1627 = vmax.f32 %v1615, 0.0
    %v1628 = vmax.f32 %v1620, 0.0
    %v1629 = vmax.f32 %v1623, 0.0
    %v1630 = vpack.c.bf16 %v1627, %v1626
    %v1631 = vpack.c.bf16 %v1629, %v1628
    %v1632 = vld [vmem:[#allocation7] sm:$0xf]
    %v1633 = vld [vmem:[#allocation7 + $0x4] sm:$0xf]
    %v1634 = vld [vmem:[#allocation7 + $0x8] sm:$0xf]
    %v1635 = vld [vmem:[#allocation7 + $0xc] sm:$0xf]
    %v1636 = vld [vmem:[#allocation7 + $0x10] sm:$0xf]
    %v1637 = vld [vmem:[#allocation7 + $0x14] sm:$0xf]
    %v1638 = vld [vmem:[#allocation7 + $0x18] sm:$0xf]
    %v1639 = vld [vmem:[#allocation7 + $0x1c] sm:$0xf]
    %v1640 = vld [vmem:[#allocation7 + $0x20] sm:$0xf]
    %v1641 = vld [vmem:[#allocation7 + $0x24] sm:$0xf]
    %v1642 = vld [vmem:[#allocation7 + $0x28] sm:$0xf]
    %v1643 = vld [vmem:[#allocation7 + $0x2c] sm:$0xf]
    %v1644 = vld [vmem:[#allocation7 + $0x30] sm:$0xf]
    %v1645 = vld [vmem:[#allocation7 + $0x34] sm:$0xf]
    %v1646 = vld [vmem:[#allocation7 + $0x38] sm:$0xf]
    %v1647 = vld [vmem:[#allocation7 + $0x3c] sm:$0xf]
    %v1648 = vld [vmem:[%s9] sm:$0x1]
    %v1650 = vlaneseq
    %v1651 = vshrl.u32 %v1650, 7
    %v1652 = vsub.s32 0, %v1651
    %v1653 = vrot.slane %v1648, %v1652
    %v1671 = vunpack.c.l.b16 %v1632
    %v1672 = vunpack.c.l.b16 %v1633
    %v1673 = vunpack.c.l.b16 %v1634
    %v1674 = vunpack.c.l.b16 %v1635
    %v1675 = vunpack.c.l.b16 %v1636
    %v1676 = vunpack.c.l.b16 %v1637
    %v1677 = vunpack.c.l.b16 %v1638
    %v1678 = vunpack.c.l.b16 %v1639
    %v1679 = vunpack.c.l.b16 %v1640
    %v1680 = vunpack.c.l.b16 %v1641
    %v1681 = vunpack.c.l.b16 %v1642
    %v1682 = vunpack.c.l.b16 %v1643
    %v1683 = vunpack.c.l.b16 %v1644
    %v1684 = vunpack.c.l.b16 %v1645
    %v1685 = vunpack.c.l.b16 %v1646
    %v1686 = vunpack.c.l.b16 %v1647
    %v1687 = vpack.c.b16 %v1672, %v1671
    %v1688 = vpack.c.b16 %v1674, %v1673
    %v1689 = vpack.c.b16 %v1676, %v1675
    %v1690 = vpack.c.b16 %v1678, %v1677
    %v1691 = vpack.c.b16 %v1680, %v1679
    %v1692 = vpack.c.b16 %v1682, %v1681
    %v1693 = vpack.c.b16 %v1684, %v1683
    %v1694 = vpack.c.b16 %v1686, %v1685
    %1703 = vmatprep.subr.bf16.mxu0 0
    %1704 = vmatpush1.bf16.msra.mxu0 %v1687
    %1705 = vmatprep.subr.bf16.mxu0 0
    %1706 = vmatpush1.bf16.msra.mxu0 %v1688
    %1707 = vmatprep.subr.bf16.mxu0 0
    %1708 = vmatpush1.bf16.msra.mxu0 %v1689
    %1709 = vmatprep.subr.bf16.mxu0 0
    %1710 = vmatpush1.bf16.msra.mxu0 %v1690
    %1711 = vmatprep.subr.bf16.mxu0 0
    %1712 = vmatpush1.bf16.msra.mxu0 %v1691
    %1713 = vmatprep.subr.bf16.mxu0 0
    %1714 = vmatpush1.bf16.msra.mxu0 %v1692
    %1715 = vmatprep.subr.bf16.mxu0 0
    %1716 = vmatpush1.bf16.msra.mxu0 %v1693
    %1717 = vmatprep.subr.bf16.mxu0 0
    %1718 = vmatpush1.bf16.msra.mxu0 %v1694
    %1719 = vmatprep.subr.bf16.mxu0 0
    %1720 = vmatpush1.bf16.msra.mxu0 0
    %1721 = vmatprep.subr.bf16.mxu0 0
    %1722 = vmatpush1.bf16.msra.mxu0 0
    %1723 = vmatprep.subr.bf16.mxu0 0
    %1724 = vmatpush1.bf16.msra.mxu0 0
    %1725 = vmatprep.subr.bf16.mxu0 0
    %1726 = vmatpush1.bf16.msra.mxu0 0
    %1727 = vmatprep.subr.bf16.mxu0 0
    %1728 = vmatpush1.bf16.msra.mxu0 0
    %1729 = vmatprep.subr.bf16.mxu0 0
    %1730 = vmatpush1.bf16.msra.mxu0 0
    %1731 = vmatprep.subr.bf16.mxu0 0
    %1732 = vmatpush1.bf16.msra.mxu0 0
    %1733 = vmatprep.subr.bf16.mxu0 0
    %1734 = vmatpush1.bf16.msra.mxu0 0
    %1735 = vmatprep.mubr.bf16.mxu0 0
    %1736 = vmatmul.mubr.bf16.gmra.mrb[0].mxu0 %v1630
    %v1737 = vpop.f32.mrb[0].mxu0
    %v1738 = vadd.f32 %v1653, %v1737
    %v1739 = vpop.f32.mrb[0].mxu0
    %v1740 = vpop.f32.mrb[0].mxu0
    %v1741 = vadd.f32 %v1653, %v1740
    %v1742 = vpop.f32.mrb[0].mxu0
    %1743 = vmatprep.mubr.bf16.mxu0 0
    %1744 = vmatmul.mubr.bf16.gmra.mrb[0].mxu0 %v1631
    %v1745 = vpop.f32.mrb[0].mxu0
    %v1746 = vadd.f32 %v1653, %v1745
    %v1747 = vpop.f32.mrb[0].mxu0
    %v1748 = vpop.f32.mrb[0].mxu0
    %v1749 = vadd.f32 %v1653, %v1748
    %v1750 = vpop.f32.mrb[0].mxu0
    %1751 = vdwg.mxu0
    %1752 = vst [vmem:[%s10] sm:$0xff] %v1738
    %1753 = vst [vmem:[%s10 + $0x8] sm:$0xff] %v1741
    %1754 = vst [vmem:[%s10 + $0x10] sm:$0xff] %v1746
    %1755 = vst [vmem:[%s10 + $0x18] sm:$0xff] %v1749
    // Predicated region
    $region58: #{cnn_rnn_forward.1} parent=1 // pred_check
      _
    $region59: #{cnn_rnn_forward.1} parent=1 // pred_check_branch
      %1757 = sbr.rel (0) target = $region61
    $region60: #{cnn_rnn_forward.1} parent=1 // pred_region
      _
    $region61: #{cnn_rnn_forward.1} parent=1 // pred_fallthru
      _
    // Predicated region
    $region62: #{cnn_rnn_forward.1} parent=1 // pred_check
      _
    $region63: #{cnn_rnn_forward.1} parent=1 // pred_check_branch
      %1759 = sbr.rel (0) target = $region65
    $region64: #{cnn_rnn_forward.1} parent=1 // pred_region
      _
    $region65: #{cnn_rnn_forward.1} parent=1 // pred_fallthru
      _
    %1760 = vsyncpa [#allocation3], 1
    %1761 = vsyncpa [#allocation5], 1
    %1762 = vsyncpa [#allocation8], 1

</llo_original>
